<compile_context>
chip_gen: v5e
topology: v5e:2x2
jax: 0.10.0
libtpu: 0.0.40
codegen_flags: <defaults>
</compile_context>

<pallas_src>
import functools

import numpy as np
import jax
import jax.numpy as jnp
from jax.experimental import pallas as pl
from jax.experimental.pallas import tpu as pltpu

BN_EPS = 1e-5  # nn.BatchNorm2d(..., eps=1e-5)


def _build_conv_masks(H, W):
    """(12, H*W) f32 boundary masks for the 7x7 zero-padded conv on the flat map.

    Rows 0..5: column masks for horizontal taps t in (-3,-2,-1,1,2,3)
               mask[k] = 1 iff (k % W) + t in [0, W)
    Rows 6..11: row masks for vertical taps d in (-3,-2,-1,1,2,3)
               mask[k] = 1 iff (k // W) + d in [0, H)
    """
    HW = H * W
    col = np.arange(HW) % W
    row = np.arange(HW) // W
    masks = []
    for t in (-3, -2, -1, 1, 2, 3):
        masks.append(((col + t >= 0) & (col + t < W)).astype(np.float32))
    for d in (-3, -2, -1, 1, 2, 3):
        masks.append(((row + d >= 0) & (row + d < H)).astype(np.float32))
    return np.stack(masks)  # (12, HW)


def _vmem_capacity_bytes():
    try:
        info = pltpu.get_tpu_info()
        for name in ("vmem_capacity_bytes", "vmem_size_bytes", "vmem_bytes"):
            v = getattr(info, name, None)
            if v:
                return int(v)
    except Exception:
        pass
    # Safe default if the query is unavailable: assume the smallest generation
    # (v7x, 64 MiB/TC) so the derived scoped limit fits every chip.
    return 64 * 1024 * 1024


def _pick_block_and_vmem(B, per_batch_bytes):
    """Batch block size + scoped VMEM limit, derived per TPU generation."""
    vmem_cap = _vmem_capacity_bytes()
    # 64 MiB scoped limit on 128-MiB parts (v5e/v6e), 48 MiB on 64-MiB parts (v7x).
    vmem_limit = int(min(64 * 1024 * 1024, (3 * vmem_cap) // 4))
    # In-kernel footprint is ~6-8x the input block bytes (double-buffered in/out
    # blocks + resident xc + ~11 (bb, HW) f32 intermediates) -> budget input at 1/8.
    block_budget = vmem_limit // 8
    bb = max(1, min(B, block_budget // max(1, per_batch_bytes)))
    if B >= 2:
        bb = min(bb, max(1, B // 2))       # >= 2 grid steps -> feed both TensorCores
    while B % bb:                          # keep the grid exactly divisible
        bb -= 1
    if B >= 2 and (B // bb) % 2:           # prefer an even step count (v7x megacore)
        even = next((d for d in range(bb, 0, -1)
                     if B % d == 0 and (B // d) % 2 == 0), None)
        if even is not None and even * 2 >= bb:
            bb = even
    return bb, vmem_limit


def cbam_kernel(x_ref, w1_ref, b1_ref, w2_ref, b2_ref, masks_ref, wc_ref, bn_ref,
                o_ref, *, W):
    # x_ref / o_ref : (bb, C, H*W)      lane-dense feature map
    # w1: (C, hid)  b1: (1, hid)  w2: (hid, C)  b2: (1, C)   channel-gate MLP
    # masks_ref: (12, HW) f32 precomputed conv boundary masks (see _build_conv_masks)
    # wc_ref: (98,) f32 SMEM = Conv2d(2,1,7,7) weight, OIHW flat;
    #         [0:49] = max-pool channel, [49:98] = mean-pool channel.
    # bn_ref: (2,) f32 SMEM = [bn_scale, bn_shift] (eval-mode BN folded).
    x = x_ref[...]                                     # (bb, C, HW), input dtype
    bb, C, HW = x.shape

    # ------------------------- Channel gate -------------------------
    avg = jnp.mean(x, axis=2, dtype=jnp.float32)       # (bb, C) = F.avg_pool2d(full)
    mx = jnp.max(x, axis=2).astype(jnp.float32)        # (bb, C) = F.max_pool2d(full)

    # Shared MLP; both pooling branches fused into a single matmul pair.
    pooled = jnp.concatenate([avg, mx], axis=0)        # (2*bb, C)
    h = jnp.dot(pooled, w1_ref[...], preferred_element_type=jnp.float32) + b1_ref[...]
    h = jnp.maximum(h, 0.0)
    a = jnp.dot(h, w2_ref[...], preferred_element_type=jnp.float32) + b2_ref[...]
    att = a[:bb] + a[bb:]                              # sum over ['avg', 'max']
    gate = jax.nn.sigmoid(att)                         # (bb, C) f32

    # xc stays resident across the whole spatial gate; keep it in the input dtype
    # (halves its footprint / re-read traffic for bf16 inputs).
    xc = x * gate.astype(x.dtype)[:, :, None]          # (bb, C, HW)

    # ------------------------- Spatial gate -------------------------
    cmax = jnp.max(xc, axis=1).astype(jnp.float32)     # (bb, HW) ChannelPool max
    cmean = jnp.mean(xc, axis=1, dtype=jnp.float32)    # (bb, HW) ChannelPool mean

    masks = masks_ref[...]                             # (12, HW) f32

    def mask_row(i):
        return masks[i][None, :]                       # broadcast over bb sublanes

    def roll_lanes(v, t):
        # out[..., k] = v[..., (k + t) % HW]  — XLU lane rotation (no VALU/ld-st cost)
        return pltpu.roll(v, (-t) % HW, axis=v.ndim - 1)

    # 7x7 zero-padded conv over the [max, mean] pooled maps, on the flat layout.
    # kj (horizontal taps) outer: each shifted/masked pair is built exactly once and
    # folded into 7 per-row-band accumulators (~11 live (bb,HW) arrays, not 16).
    # TODO(synk): on v7x (VALU-bound regime) these 196 FMAs could be offloaded to
    # the idle MXU by stacking the 14 shifted maps and doing a (7,14) matmul.
    bands = [None] * 7
    for kj in range(7):
        t = kj - 3
        if t == 0:
            sm, sv = cmax, cmean
        else:
            m = mask_row(t + 3 if t < 0 else t + 2)    # column-boundary mask
            sm = roll_lanes(cmax, t) * m
            sv = roll_lanes(cmean, t) * m
        for ki in range(7):
            term = wc_ref[ki * 7 + kj] * sm + wc_ref[49 + ki * 7 + kj] * sv
            bands[ki] = term if bands[ki] is None else bands[ki] + term

    # Vertical taps: one lane roll by (ki-3)*W per band + row-boundary mask.
    acc = None
    for ki in range(7):
        d = ki - 3
        band = bands[ki]
        if d != 0:
            band = roll_lanes(band, d * W) * mask_row(6 + (d + 3 if d < 0 else d + 2))
        acc = band if acc is None else acc + band

    # Eval-mode BatchNorm2d(1) folded to scale/shift.
    # TODO(synk): train-mode BN (batch statistics) is not implemented; eval-mode
    # running stats + affine params only.
    y = acc * bn_ref[0] + bn_ref[1]
    s = jax.nn.sigmoid(y)                              # (bb, HW) spatial attention
    o_ref[...] = (xc * s[:, None, :]).astype(o_ref.dtype)


def cbam_forward(x, params):
    B, C, H, W = x.shape
    HW = H * W
    hidden = params["w1"].shape[1]
    x_flat = x.reshape(B, C, HW)

    per_batch = C * HW * x.dtype.itemsize
    bb, vmem_limit = _pick_block_and_vmem(B, per_batch)

    # Fold eval-mode BatchNorm into scale/shift scalars (read from SMEM in-kernel).
    gamma, beta, mean, var = (params["bn"][i] for i in range(4))
    bn_scale = gamma / jnp.sqrt(var + BN_EPS)
    bn_shift = beta - mean * bn_scale
    bn_vec = jnp.stack([bn_scale, bn_shift]).astype(jnp.float32)

    masks = jnp.asarray(_build_conv_masks(H, W))       # (12, HW) f32, compile-time

    # TODO(synk): when H*W is not a multiple of 128 (e.g. 14x14 / 7x7 stages) the
    # output store becomes a masked vst; pack several images along the last dim to
    # keep the stored slab lane-dense in that case.
    kernel = functools.partial(cbam_kernel, W=W)
    out_flat = pl.pallas_call(
        kernel,
        out_shape=jax.ShapeDtypeStruct((B, C, HW), x.dtype),
        grid=(B // bb,),
        in_specs=[
            pl.BlockSpec((bb, C, HW), lambda b: (b, 0, 0)),
            pl.BlockSpec((C, hidden), lambda b: (0, 0)),
            pl.BlockSpec((1, hidden), lambda b: (0, 0)),
            pl.BlockSpec((hidden, C), lambda b: (0, 0)),
            pl.BlockSpec((1, C), lambda b: (0, 0)),
            pl.BlockSpec((12, HW), lambda b: (0, 0)),                # conv masks
            pl.BlockSpec(memory_space=pltpu.MemorySpace.SMEM),       # conv weights (98,)
            pl.BlockSpec(memory_space=pltpu.MemorySpace.SMEM),       # folded BN (2,)
        ],
        out_specs=pl.BlockSpec((bb, C, HW), lambda b: (b, 0, 0)),
        compiler_params=pltpu.CompilerParams(
            dimension_semantics=("parallel",),
            vmem_limit_bytes=vmem_limit),
    )(x_flat, params["w1"], params["b1"], params["w2"], params["b2"],
      masks, params["wconv"].astype(jnp.float32), bn_vec)
    return out_flat.reshape(B, C, H, W)


# ----------------------------------------------------------------------------
# Pure-JAX reference (for verification)
# ----------------------------------------------------------------------------
def cbam_reference(x, params):
    avg = jnp.mean(x, axis=(2, 3))
    mx = jnp.max(x, axis=(2, 3))

    def mlp(p):
        h = jnp.maximum(p @ params["w1"] + params["b1"], 0.0)
        return h @ params["w2"] + params["b2"]

    att = mlp(avg) + mlp(mx)
    xc = x * jax.nn.sigmoid(att)[:, :, None, None]

    cmax = jnp.max(xc, axis=1)
    cmean = jnp.mean(xc, axis=1)
    pooled = jnp.stack([cmax, cmean], axis=1)                 # (B, 2, H, W)
    wconv = params["wconv"].reshape(1, 2, 7, 7)
    conv = jax.lax.conv_general_dilated(
        pooled, wconv, window_strides=(1, 1), padding=((3, 3), (3, 3)),
        dimension_numbers=("NCHW", "OIHW", "NCHW"))
    gamma, beta, mean, var = (params["bn"][i] for i in range(4))
    y = gamma * (conv - mean) / jnp.sqrt(var + BN_EPS) + beta
    return xc * jax.nn.sigmoid(y)


if __name__ == "__main__":
    # gate_channels=32, reduction_ratio=16 -> hidden=2, pool_types=['avg','max']
    B, C, H, W = 4, 32, 16, 16
    hidden = C // 16

    key = jax.random.PRNGKey(0)
    k1, k2, k3, k4, k5, k6, kx = jax.random.split(key, 7)
    params = {
        "w1": jax.random.normal(k1, (C, hidden), jnp.float32) * 0.2,      # Linear(C, C//r)
        "b1": jax.random.normal(k2, (1, hidden), jnp.float32) * 0.1,
        "w2": jax.random.normal(k3, (hidden, C), jnp.float32) * 0.2,      # Linear(C//r, C)
        "b2": jax.random.normal(k4, (1, C), jnp.float32) * 0.1,
        "wconv": jax.random.normal(k5, (2 * 7 * 7,), jnp.float32) * 0.1,  # Conv2d(2,1,7) OIHW flat
        # BatchNorm2d(1): [gamma, beta, running_mean, running_var]
        "bn": jnp.array([1.0, 0.0, 0.0, 1.0], jnp.float32)
              + jax.random.normal(k6, (4,), jnp.float32) * jnp.array([0.1, 0.1, 0.1, 0.05]),
    }
    x = jax.random.normal(kx, (B, C, H, W), jnp.float32)

    out = jax.block_until_ready(cbam_forward(x, params))
    ref = cbam_reference(x, params)

    assert out.shape == x.shape and out.dtype == x.dtype
    np.testing.assert_allclose(np.asarray(out), np.asarray(ref), atol=5e-5, rtol=5e-5)
    print("KERNEL_OK")
</pallas_src>

<mosaic_0001>
module attributes {stable_mosaic.version = 11 : i64} {
  func.func @cbam_kernel(%arg0: i32, %arg1: memref<2x32x256xf32, #tpu.memory_space<vmem>>, %arg2: memref<32x2xf32, #tpu.memory_space<vmem>>, %arg3: memref<1x2xf32, #tpu.memory_space<vmem>>, %arg4: memref<2x32xf32, #tpu.memory_space<vmem>>, %arg5: memref<1x32xf32, #tpu.memory_space<vmem>>, %arg6: memref<12x256xf32, #tpu.memory_space<vmem>>, %arg7: memref<98xf32, #tpu.memory_space<smem>>, %arg8: memref<2xf32, #tpu.memory_space<smem>>, %arg9: memref<2x32x256xf32, #tpu.memory_space<vmem>>) attributes {dimension_semantics = [#tpu.dimension_semantics<parallel>], iteration_bounds = array<i64: 2>, scalar_prefetch = 0 : i64, scratch_operands = 0 : i64, tpu.core_type = #tpu.core_type<tc>, window_params = [{transform_indices = @transform_0, window_bounds = array<i64: 2, 32, 256>}, {pipeline_mode = #tpu.pipeline_mode<synchronous>, transform_indices = @transform_1, window_bounds = array<i64: 32, 2>}, {pipeline_mode = #tpu.pipeline_mode<synchronous>, transform_indices = @transform_2, window_bounds = array<i64: 1, 2>}, {pipeline_mode = #tpu.pipeline_mode<synchronous>, transform_indices = @transform_3, window_bounds = array<i64: 2, 32>}, {pipeline_mode = #tpu.pipeline_mode<synchronous>, transform_indices = @transform_4, window_bounds = array<i64: 1, 32>}, {pipeline_mode = #tpu.pipeline_mode<synchronous>, transform_indices = @transform_5, window_bounds = array<i64: 12, 256>}, {transform_indices = @transform_6, window_bounds = array<i64: 98>}, {transform_indices = @transform_7, window_bounds = array<i64: 2>}, {transform_indices = @transform_8, window_bounds = array<i64: 2, 32, 256>}]} {
    %c0 = arith.constant 0 : index
    %c0_0 = arith.constant 0 : index
    %c0_1 = arith.constant 0 : index
    %0 = vector.load %arg1[%c0, %c0_0, %c0_1] : memref<2x32x256xf32, #tpu.memory_space<vmem>>, vector<2x32x256xf32>
    %cst = arith.constant dense<0.000000e+00> : vector<2x32xf32>
    %1 = vector.multi_reduction <add>, %0, %cst [2] : vector<2x32x256xf32> to vector<2x32xf32>
    %cst_2 = arith.constant 2.560000e+02 : f32
    %2 = vector.broadcast %cst_2 : f32 to vector<2x32xf32>
    %3 = arith.divf %1, %2 : vector<2x32xf32>
    %cst_3 = arith.constant dense<0xFF800000> : vector<2x32xf32>
    %4 = vector.multi_reduction <maximumf>, %0, %cst_3 [2] : vector<2x32x256xf32> to vector<2x32xf32>
    %5 = tpu.concatenate %3, %4 in 0 : vector<2x32xf32>, vector<2x32xf32> -> vector<4x32xf32>
    %c0_4 = arith.constant 0 : index
    %c0_5 = arith.constant 0 : index
    %6 = vector.load %arg2[%c0_4, %c0_5] : memref<32x2xf32, #tpu.memory_space<vmem>>, vector<32x2xf32>
    %cst_6 = arith.constant dense<0.000000e+00> : vector<4x2xf32>
    %7 = tpu.matmul %5, %6, %cst_6 {dimension_numbers = #tpu.dot_dimension_numbers<[1], [0], [0], [1], [0, 0, 1, 1], [], []>} : vector<4x32xf32>, vector<32x2xf32>, vector<4x2xf32> -> vector<4x2xf32>
    %c0_7 = arith.constant 0 : index
    %c0_8 = arith.constant 0 : index
    %8 = vector.load %arg3[%c0_7, %c0_8] : memref<1x2xf32, #tpu.memory_space<vmem>>, vector<1x2xf32>
    %9 = vector.broadcast %8 : vector<1x2xf32> to vector<4x2xf32>
    %10 = arith.addf %7, %9 : vector<4x2xf32>
    %cst_9 = arith.constant 0.000000e+00 : f32
    %11 = vector.broadcast %cst_9 : f32 to vector<4x2xf32>
    %12 = arith.maximumf %10, %11 : vector<4x2xf32>
    %c0_10 = arith.constant 0 : index
    %c0_11 = arith.constant 0 : index
    %13 = vector.load %arg4[%c0_10, %c0_11] : memref<2x32xf32, #tpu.memory_space<vmem>>, vector<2x32xf32>
    %cst_12 = arith.constant dense<0.000000e+00> : vector<4x32xf32>
    %14 = tpu.matmul %12, %13, %cst_12 {dimension_numbers = #tpu.dot_dimension_numbers<[1], [0], [0], [1], [0, 0, 1, 1], [], []>} : vector<4x2xf32>, vector<2x32xf32>, vector<4x32xf32> -> vector<4x32xf32>
    %c0_13 = arith.constant 0 : index
    %c0_14 = arith.constant 0 : index
    %15 = vector.load %arg5[%c0_13, %c0_14] : memref<1x32xf32, #tpu.memory_space<vmem>>, vector<1x32xf32>
    %16 = vector.broadcast %15 : vector<1x32xf32> to vector<4x32xf32>
    %17 = arith.addf %14, %16 : vector<4x32xf32>
    %18 = vector.extract_strided_slice %17 {offsets = [0, 0], sizes = [2, 32], strides = [1, 1]} : vector<4x32xf32> to vector<2x32xf32>
    %19 = vector.extract_strided_slice %17 {offsets = [2, 0], sizes = [2, 32], strides = [1, 1]} : vector<4x32xf32> to vector<2x32xf32>
    %20 = arith.addf %18, %19 : vector<2x32xf32>
    %21 = arith.negf %20 : vector<2x32xf32>
    %22 = math.exp %21 : vector<2x32xf32>
    %cst_15 = arith.constant 1.000000e+00 : f32
    %23 = vector.broadcast %cst_15 : f32 to vector<2x32xf32>
    %24 = arith.addf %23, %22 : vector<2x32xf32>
    %25 = arith.divf %23, %24 : vector<2x32xf32>
    %26 = vector.shape_cast %25 : vector<2x32xf32> to vector<2x32x1xf32>
    %27 = vector.broadcast %26 : vector<2x32x1xf32> to vector<2x32x256xf32>
    %28 = arith.mulf %0, %27 : vector<2x32x256xf32>
    %cst_16 = arith.constant dense<0xFF800000> : vector<2x256xf32>
    %29 = vector.multi_reduction <maximumf>, %28, %cst_16 [1] : vector<2x32x256xf32> to vector<2x256xf32>
    %cst_17 = arith.constant dense<0.000000e+00> : vector<2x256xf32>
    %30 = vector.multi_reduction <add>, %28, %cst_17 [1] : vector<2x32x256xf32> to vector<2x256xf32>
    %cst_18 = arith.constant 3.200000e+01 : f32
    %31 = vector.broadcast %cst_18 : f32 to vector<2x256xf32>
    %32 = arith.divf %30, %31 : vector<2x256xf32>
    %c0_19 = arith.constant 0 : index
    %c0_20 = arith.constant 0 : index
    %33 = vector.load %arg6[%c0_19, %c0_20] : memref<12x256xf32, #tpu.memory_space<vmem>>, vector<12x256xf32>
    %34 = vector.extract_strided_slice %33 {offsets = [0, 0], sizes = [1, 256], strides = [1, 1]} : vector<12x256xf32> to vector<1x256xf32>
    %35 = vector.shape_cast %34 : vector<1x256xf32> to vector<256xf32>
    %36 = vector.shape_cast %35 : vector<256xf32> to vector<1x256xf32>
    %c3_i32 = arith.constant 3 : i32
    %37 = tpu.dynamic_rotate %29 by %c3_i32 dim 1 : vector<2x256xf32>, i32 -> vector<2x256xf32>
    %38 = vector.broadcast %36 : vector<1x256xf32> to vector<2x256xf32>
    %39 = arith.mulf %37, %38 : vector<2x256xf32>
    %c3_i32_21 = arith.constant 3 : i32
    %40 = tpu.dynamic_rotate %32 by %c3_i32_21 dim 1 : vector<2x256xf32>, i32 -> vector<2x256xf32>
    %41 = vector.broadcast %36 : vector<1x256xf32> to vector<2x256xf32>
    %42 = arith.mulf %40, %41 : vector<2x256xf32>
    %c0_22 = arith.constant 0 : index
    %43 = memref.load %arg7[%c0_22] : memref<98xf32, #tpu.memory_space<smem>>
    %44 = vector.broadcast %43 : f32 to vector<2x256xf32>
    %45 = arith.mulf %44, %39 : vector<2x256xf32>
    %c49 = arith.constant 49 : index
    %46 = memref.load %arg7[%c49] : memref<98xf32, #tpu.memory_space<smem>>
    %47 = vector.broadcast %46 : f32 to vector<2x256xf32>
    %48 = arith.mulf %47, %42 : vector<2x256xf32>
    %49 = arith.addf %45, %48 : vector<2x256xf32>
    %c7 = arith.constant 7 : index
    %50 = memref.load %arg7[%c7] : memref<98xf32, #tpu.memory_space<smem>>
    %51 = vector.broadcast %50 : f32 to vector<2x256xf32>
    %52 = arith.mulf %51, %39 : vector<2x256xf32>
    %c56 = arith.constant 56 : index
    %53 = memref.load %arg7[%c56] : memref<98xf32, #tpu.memory_space<smem>>
    %54 = vector.broadcast %53 : f32 to vector<2x256xf32>
    %55 = arith.mulf %54, %42 : vector<2x256xf32>
    %56 = arith.addf %52, %55 : vector<2x256xf32>
    %c14 = arith.constant 14 : index
    %57 = memref.load %arg7[%c14] : memref<98xf32, #tpu.memory_space<smem>>
    %58 = vector.broadcast %57 : f32 to vector<2x256xf32>
    %59 = arith.mulf %58, %39 : vector<2x256xf32>
    %c63 = arith.constant 63 : index
    %60 = memref.load %arg7[%c63] : memref<98xf32, #tpu.memory_space<smem>>
    %61 = vector.broadcast %60 : f32 to vector<2x256xf32>
    %62 = arith.mulf %61, %42 : vector<2x256xf32>
    %63 = arith.addf %59, %62 : vector<2x256xf32>
    %c21 = arith.constant 21 : index
    %64 = memref.load %arg7[%c21] : memref<98xf32, #tpu.memory_space<smem>>
    %65 = vector.broadcast %64 : f32 to vector<2x256xf32>
    %66 = arith.mulf %65, %39 : vector<2x256xf32>
    %c70 = arith.constant 70 : index
    %67 = memref.load %arg7[%c70] : memref<98xf32, #tpu.memory_space<smem>>
    %68 = vector.broadcast %67 : f32 to vector<2x256xf32>
    %69 = arith.mulf %68, %42 : vector<2x256xf32>
    %70 = arith.addf %66, %69 : vector<2x256xf32>
    %c28 = arith.constant 28 : index
    %71 = memref.load %arg7[%c28] : memref<98xf32, #tpu.memory_space<smem>>
    %72 = vector.broadcast %71 : f32 to vector<2x256xf32>
    %73 = arith.mulf %72, %39 : vector<2x256xf32>
    %c77 = arith.constant 77 : index
    %74 = memref.load %arg7[%c77] : memref<98xf32, #tpu.memory_space<smem>>
    %75 = vector.broadcast %74 : f32 to vector<2x256xf32>
    %76 = arith.mulf %75, %42 : vector<2x256xf32>
    %77 = arith.addf %73, %76 : vector<2x256xf32>
    %c35 = arith.constant 35 : index
    %78 = memref.load %arg7[%c35] : memref<98xf32, #tpu.memory_space<smem>>
    %79 = vector.broadcast %78 : f32 to vector<2x256xf32>
    %80 = arith.mulf %79, %39 : vector<2x256xf32>
    %c84 = arith.constant 84 : index
    %81 = memref.load %arg7[%c84] : memref<98xf32, #tpu.memory_space<smem>>
    %82 = vector.broadcast %81 : f32 to vector<2x256xf32>
    %83 = arith.mulf %82, %42 : vector<2x256xf32>
    %84 = arith.addf %80, %83 : vector<2x256xf32>
    %c42 = arith.constant 42 : index
    %85 = memref.load %arg7[%c42] : memref<98xf32, #tpu.memory_space<smem>>
    %86 = vector.broadcast %85 : f32 to vector<2x256xf32>
    %87 = arith.mulf %86, %39 : vector<2x256xf32>
    %c91 = arith.constant 91 : index
    %88 = memref.load %arg7[%c91] : memref<98xf32, #tpu.memory_space<smem>>
    %89 = vector.broadcast %88 : f32 to vector<2x256xf32>
    %90 = arith.mulf %89, %42 : vector<2x256xf32>
    %91 = arith.addf %87, %90 : vector<2x256xf32>
    %92 = vector.extract_strided_slice %33 {offsets = [1, 0], sizes = [1, 256], strides = [1, 1]} : vector<12x256xf32> to vector<1x256xf32>
    %93 = vector.shape_cast %92 : vector<1x256xf32> to vector<256xf32>
    %94 = vector.shape_cast %93 : vector<256xf32> to vector<1x256xf32>
    %c2_i32 = arith.constant 2 : i32
    %95 = tpu.dynamic_rotate %29 by %c2_i32 dim 1 : vector<2x256xf32>, i32 -> vector<2x256xf32>
    %96 = vector.broadcast %94 : vector<1x256xf32> to vector<2x256xf32>
    %97 = arith.mulf %95, %96 : vector<2x256xf32>
    %c2_i32_23 = arith.constant 2 : i32
    %98 = tpu.dynamic_rotate %32 by %c2_i32_23 dim 1 : vector<2x256xf32>, i32 -> vector<2x256xf32>
    %99 = vector.broadcast %94 : vector<1x256xf32> to vector<2x256xf32>
    %100 = arith.mulf %98, %99 : vector<2x256xf32>
    %c1 = arith.constant 1 : index
    %101 = memref.load %arg7[%c1] : memref<98xf32, #tpu.memory_space<smem>>
    %102 = vector.broadcast %101 : f32 to vector<2x256xf32>
    %103 = arith.mulf %102, %97 : vector<2x256xf32>
    %c50 = arith.constant 50 : index
    %104 = memref.load %arg7[%c50] : memref<98xf32, #tpu.memory_space<smem>>
    %105 = vector.broadcast %104 : f32 to vector<2x256xf32>
    %106 = arith.mulf %105, %100 : vector<2x256xf32>
    %107 = arith.addf %103, %106 : vector<2x256xf32>
    %108 = arith.addf %49, %107 : vector<2x256xf32>
    %c8 = arith.constant 8 : index
    %109 = memref.load %arg7[%c8] : memref<98xf32, #tpu.memory_space<smem>>
    %110 = vector.broadcast %109 : f32 to vector<2x256xf32>
    %111 = arith.mulf %110, %97 : vector<2x256xf32>
    %c57 = arith.constant 57 : index
    %112 = memref.load %arg7[%c57] : memref<98xf32, #tpu.memory_space<smem>>
    %113 = vector.broadcast %112 : f32 to vector<2x256xf32>
    %114 = arith.mulf %113, %100 : vector<2x256xf32>
    %115 = arith.addf %111, %114 : vector<2x256xf32>
    %116 = arith.addf %56, %115 : vector<2x256xf32>
    %c15 = arith.constant 15 : index
    %117 = memref.load %arg7[%c15] : memref<98xf32, #tpu.memory_space<smem>>
    %118 = vector.broadcast %117 : f32 to vector<2x256xf32>
    %119 = arith.mulf %118, %97 : vector<2x256xf32>
    %c64 = arith.constant 64 : index
    %120 = memref.load %arg7[%c64] : memref<98xf32, #tpu.memory_space<smem>>
    %121 = vector.broadcast %120 : f32 to vector<2x256xf32>
    %122 = arith.mulf %121, %100 : vector<2x256xf32>
    %123 = arith.addf %119, %122 : vector<2x256xf32>
    %124 = arith.addf %63, %123 : vector<2x256xf32>
    %c22 = arith.constant 22 : index
    %125 = memref.load %arg7[%c22] : memref<98xf32, #tpu.memory_space<smem>>
    %126 = vector.broadcast %125 : f32 to vector<2x256xf32>
    %127 = arith.mulf %126, %97 : vector<2x256xf32>
    %c71 = arith.constant 71 : index
    %128 = memref.load %arg7[%c71] : memref<98xf32, #tpu.memory_space<smem>>
    %129 = vector.broadcast %128 : f32 to vector<2x256xf32>
    %130 = arith.mulf %129, %100 : vector<2x256xf32>
    %131 = arith.addf %127, %130 : vector<2x256xf32>
    %132 = arith.addf %70, %131 : vector<2x256xf32>
    %c29 = arith.constant 29 : index
    %133 = memref.load %arg7[%c29] : memref<98xf32, #tpu.memory_space<smem>>
    %134 = vector.broadcast %133 : f32 to vector<2x256xf32>
    %135 = arith.mulf %134, %97 : vector<2x256xf32>
    %c78 = arith.constant 78 : index
    %136 = memref.load %arg7[%c78] : memref<98xf32, #tpu.memory_space<smem>>
    %137 = vector.broadcast %136 : f32 to vector<2x256xf32>
    %138 = arith.mulf %137, %100 : vector<2x256xf32>
    %139 = arith.addf %135, %138 : vector<2x256xf32>
    %140 = arith.addf %77, %139 : vector<2x256xf32>
    %c36 = arith.constant 36 : index
    %141 = memref.load %arg7[%c36] : memref<98xf32, #tpu.memory_space<smem>>
    %142 = vector.broadcast %141 : f32 to vector<2x256xf32>
    %143 = arith.mulf %142, %97 : vector<2x256xf32>
    %c85 = arith.constant 85 : index
    %144 = memref.load %arg7[%c85] : memref<98xf32, #tpu.memory_space<smem>>
    %145 = vector.broadcast %144 : f32 to vector<2x256xf32>
    %146 = arith.mulf %145, %100 : vector<2x256xf32>
    %147 = arith.addf %143, %146 : vector<2x256xf32>
    %148 = arith.addf %84, %147 : vector<2x256xf32>
    %c43 = arith.constant 43 : index
    %149 = memref.load %arg7[%c43] : memref<98xf32, #tpu.memory_space<smem>>
    %150 = vector.broadcast %149 : f32 to vector<2x256xf32>
    %151 = arith.mulf %150, %97 : vector<2x256xf32>
    %c92 = arith.constant 92 : index
    %152 = memref.load %arg7[%c92] : memref<98xf32, #tpu.memory_space<smem>>
    %153 = vector.broadcast %152 : f32 to vector<2x256xf32>
    %154 = arith.mulf %153, %100 : vector<2x256xf32>
    %155 = arith.addf %151, %154 : vector<2x256xf32>
    %156 = arith.addf %91, %155 : vector<2x256xf32>
    %157 = vector.extract_strided_slice %33 {offsets = [2, 0], sizes = [1, 256], strides = [1, 1]} : vector<12x256xf32> to vector<1x256xf32>
    %158 = vector.shape_cast %157 : vector<1x256xf32> to vector<256xf32>
    %159 = vector.shape_cast %158 : vector<256xf32> to vector<1x256xf32>
    %c1_i32 = arith.constant 1 : i32
    %160 = tpu.dynamic_rotate %29 by %c1_i32 dim 1 : vector<2x256xf32>, i32 -> vector<2x256xf32>
    %161 = vector.broadcast %159 : vector<1x256xf32> to vector<2x256xf32>
    %162 = arith.mulf %160, %161 : vector<2x256xf32>
    %c1_i32_24 = arith.constant 1 : i32
    %163 = tpu.dynamic_rotate %32 by %c1_i32_24 dim 1 : vector<2x256xf32>, i32 -> vector<2x256xf32>
    %164 = vector.broadcast %159 : vector<1x256xf32> to vector<2x256xf32>
    %165 = arith.mulf %163, %164 : vector<2x256xf32>
    %c2 = arith.constant 2 : index
    %166 = memref.load %arg7[%c2] : memref<98xf32, #tpu.memory_space<smem>>
    %167 = vector.broadcast %166 : f32 to vector<2x256xf32>
    %168 = arith.mulf %167, %162 : vector<2x256xf32>
    %c51 = arith.constant 51 : index
    %169 = memref.load %arg7[%c51] : memref<98xf32, #tpu.memory_space<smem>>
    %170 = vector.broadcast %169 : f32 to vector<2x256xf32>
    %171 = arith.mulf %170, %165 : vector<2x256xf32>
    %172 = arith.addf %168, %171 : vector<2x256xf32>
    %173 = arith.addf %108, %172 : vector<2x256xf32>
    %c9 = arith.constant 9 : index
    %174 = memref.load %arg7[%c9] : memref<98xf32, #tpu.memory_space<smem>>
    %175 = vector.broadcast %174 : f32 to vector<2x256xf32>
    %176 = arith.mulf %175, %162 : vector<2x256xf32>
    %c58 = arith.constant 58 : index
    %177 = memref.load %arg7[%c58] : memref<98xf32, #tpu.memory_space<smem>>
    %178 = vector.broadcast %177 : f32 to vector<2x256xf32>
    %179 = arith.mulf %178, %165 : vector<2x256xf32>
    %180 = arith.addf %176, %179 : vector<2x256xf32>
    %181 = arith.addf %116, %180 : vector<2x256xf32>
    %c16 = arith.constant 16 : index
    %182 = memref.load %arg7[%c16] : memref<98xf32, #tpu.memory_space<smem>>
    %183 = vector.broadcast %182 : f32 to vector<2x256xf32>
    %184 = arith.mulf %183, %162 : vector<2x256xf32>
    %c65 = arith.constant 65 : index
    %185 = memref.load %arg7[%c65] : memref<98xf32, #tpu.memory_space<smem>>
    %186 = vector.broadcast %185 : f32 to vector<2x256xf32>
    %187 = arith.mulf %186, %165 : vector<2x256xf32>
    %188 = arith.addf %184, %187 : vector<2x256xf32>
    %189 = arith.addf %124, %188 : vector<2x256xf32>
    %c23 = arith.constant 23 : index
    %190 = memref.load %arg7[%c23] : memref<98xf32, #tpu.memory_space<smem>>
    %191 = vector.broadcast %190 : f32 to vector<2x256xf32>
    %192 = arith.mulf %191, %162 : vector<2x256xf32>
    %c72 = arith.constant 72 : index
    %193 = memref.load %arg7[%c72] : memref<98xf32, #tpu.memory_space<smem>>
    %194 = vector.broadcast %193 : f32 to vector<2x256xf32>
    %195 = arith.mulf %194, %165 : vector<2x256xf32>
    %196 = arith.addf %192, %195 : vector<2x256xf32>
    %197 = arith.addf %132, %196 : vector<2x256xf32>
    %c30 = arith.constant 30 : index
    %198 = memref.load %arg7[%c30] : memref<98xf32, #tpu.memory_space<smem>>
    %199 = vector.broadcast %198 : f32 to vector<2x256xf32>
    %200 = arith.mulf %199, %162 : vector<2x256xf32>
    %c79 = arith.constant 79 : index
    %201 = memref.load %arg7[%c79] : memref<98xf32, #tpu.memory_space<smem>>
    %202 = vector.broadcast %201 : f32 to vector<2x256xf32>
    %203 = arith.mulf %202, %165 : vector<2x256xf32>
    %204 = arith.addf %200, %203 : vector<2x256xf32>
    %205 = arith.addf %140, %204 : vector<2x256xf32>
    %c37 = arith.constant 37 : index
    %206 = memref.load %arg7[%c37] : memref<98xf32, #tpu.memory_space<smem>>
    %207 = vector.broadcast %206 : f32 to vector<2x256xf32>
    %208 = arith.mulf %207, %162 : vector<2x256xf32>
    %c86 = arith.constant 86 : index
    %209 = memref.load %arg7[%c86] : memref<98xf32, #tpu.memory_space<smem>>
    %210 = vector.broadcast %209 : f32 to vector<2x256xf32>
    %211 = arith.mulf %210, %165 : vector<2x256xf32>
    %212 = arith.addf %208, %211 : vector<2x256xf32>
    %213 = arith.addf %148, %212 : vector<2x256xf32>
    %c44 = arith.constant 44 : index
    %214 = memref.load %arg7[%c44] : memref<98xf32, #tpu.memory_space<smem>>
    %215 = vector.broadcast %214 : f32 to vector<2x256xf32>
    %216 = arith.mulf %215, %162 : vector<2x256xf32>
    %c93 = arith.constant 93 : index
    %217 = memref.load %arg7[%c93] : memref<98xf32, #tpu.memory_space<smem>>
    %218 = vector.broadcast %217 : f32 to vector<2x256xf32>
    %219 = arith.mulf %218, %165 : vector<2x256xf32>
    %220 = arith.addf %216, %219 : vector<2x256xf32>
    %221 = arith.addf %156, %220 : vector<2x256xf32>
    %c3 = arith.constant 3 : index
    %222 = memref.load %arg7[%c3] : memref<98xf32, #tpu.memory_space<smem>>
    %223 = vector.broadcast %222 : f32 to vector<2x256xf32>
    %224 = arith.mulf %223, %29 : vector<2x256xf32>
    %c52 = arith.constant 52 : index
    %225 = memref.load %arg7[%c52] : memref<98xf32, #tpu.memory_space<smem>>
    %226 = vector.broadcast %225 : f32 to vector<2x256xf32>
    %227 = arith.mulf %226, %32 : vector<2x256xf32>
    %228 = arith.addf %224, %227 : vector<2x256xf32>
    %229 = arith.addf %173, %228 : vector<2x256xf32>
    %c10 = arith.constant 10 : index
    %230 = memref.load %arg7[%c10] : memref<98xf32, #tpu.memory_space<smem>>
    %231 = vector.broadcast %230 : f32 to vector<2x256xf32>
    %232 = arith.mulf %231, %29 : vector<2x256xf32>
    %c59 = arith.constant 59 : index
    %233 = memref.load %arg7[%c59] : memref<98xf32, #tpu.memory_space<smem>>
    %234 = vector.broadcast %233 : f32 to vector<2x256xf32>
    %235 = arith.mulf %234, %32 : vector<2x256xf32>
    %236 = arith.addf %232, %235 : vector<2x256xf32>
    %237 = arith.addf %181, %236 : vector<2x256xf32>
    %c17 = arith.constant 17 : index
    %238 = memref.load %arg7[%c17] : memref<98xf32, #tpu.memory_space<smem>>
    %239 = vector.broadcast %238 : f32 to vector<2x256xf32>
    %240 = arith.mulf %239, %29 : vector<2x256xf32>
    %c66 = arith.constant 66 : index
    %241 = memref.load %arg7[%c66] : memref<98xf32, #tpu.memory_space<smem>>
    %242 = vector.broadcast %241 : f32 to vector<2x256xf32>
    %243 = arith.mulf %242, %32 : vector<2x256xf32>
    %244 = arith.addf %240, %243 : vector<2x256xf32>
    %245 = arith.addf %189, %244 : vector<2x256xf32>
    %c24 = arith.constant 24 : index
    %246 = memref.load %arg7[%c24] : memref<98xf32, #tpu.memory_space<smem>>
    %247 = vector.broadcast %246 : f32 to vector<2x256xf32>
    %248 = arith.mulf %247, %29 : vector<2x256xf32>
    %c73 = arith.constant 73 : index
    %249 = memref.load %arg7[%c73] : memref<98xf32, #tpu.memory_space<smem>>
    %250 = vector.broadcast %249 : f32 to vector<2x256xf32>
    %251 = arith.mulf %250, %32 : vector<2x256xf32>
    %252 = arith.addf %248, %251 : vector<2x256xf32>
    %253 = arith.addf %197, %252 : vector<2x256xf32>
    %c31 = arith.constant 31 : index
    %254 = memref.load %arg7[%c31] : memref<98xf32, #tpu.memory_space<smem>>
    %255 = vector.broadcast %254 : f32 to vector<2x256xf32>
    %256 = arith.mulf %255, %29 : vector<2x256xf32>
    %c80 = arith.constant 80 : index
    %257 = memref.load %arg7[%c80] : memref<98xf32, #tpu.memory_space<smem>>
    %258 = vector.broadcast %257 : f32 to vector<2x256xf32>
    %259 = arith.mulf %258, %32 : vector<2x256xf32>
    %260 = arith.addf %256, %259 : vector<2x256xf32>
    %261 = arith.addf %205, %260 : vector<2x256xf32>
    %c38 = arith.constant 38 : index
    %262 = memref.load %arg7[%c38] : memref<98xf32, #tpu.memory_space<smem>>
    %263 = vector.broadcast %262 : f32 to vector<2x256xf32>
    %264 = arith.mulf %263, %29 : vector<2x256xf32>
    %c87 = arith.constant 87 : index
    %265 = memref.load %arg7[%c87] : memref<98xf32, #tpu.memory_space<smem>>
    %266 = vector.broadcast %265 : f32 to vector<2x256xf32>
    %267 = arith.mulf %266, %32 : vector<2x256xf32>
    %268 = arith.addf %264, %267 : vector<2x256xf32>
    %269 = arith.addf %213, %268 : vector<2x256xf32>
    %c45 = arith.constant 45 : index
    %270 = memref.load %arg7[%c45] : memref<98xf32, #tpu.memory_space<smem>>
    %271 = vector.broadcast %270 : f32 to vector<2x256xf32>
    %272 = arith.mulf %271, %29 : vector<2x256xf32>
    %c94 = arith.constant 94 : index
    %273 = memref.load %arg7[%c94] : memref<98xf32, #tpu.memory_space<smem>>
    %274 = vector.broadcast %273 : f32 to vector<2x256xf32>
    %275 = arith.mulf %274, %32 : vector<2x256xf32>
    %276 = arith.addf %272, %275 : vector<2x256xf32>
    %277 = arith.addf %221, %276 : vector<2x256xf32>
    %278 = vector.extract_strided_slice %33 {offsets = [3, 0], sizes = [1, 256], strides = [1, 1]} : vector<12x256xf32> to vector<1x256xf32>
    %279 = vector.shape_cast %278 : vector<1x256xf32> to vector<256xf32>
    %280 = vector.shape_cast %279 : vector<256xf32> to vector<1x256xf32>
    %c255_i32 = arith.constant 255 : i32
    %281 = tpu.dynamic_rotate %29 by %c255_i32 dim 1 : vector<2x256xf32>, i32 -> vector<2x256xf32>
    %282 = vector.broadcast %280 : vector<1x256xf32> to vector<2x256xf32>
    %283 = arith.mulf %281, %282 : vector<2x256xf32>
    %c255_i32_25 = arith.constant 255 : i32
    %284 = tpu.dynamic_rotate %32 by %c255_i32_25 dim 1 : vector<2x256xf32>, i32 -> vector<2x256xf32>
    %285 = vector.broadcast %280 : vector<1x256xf32> to vector<2x256xf32>
    %286 = arith.mulf %284, %285 : vector<2x256xf32>
    %c4 = arith.constant 4 : index
    %287 = memref.load %arg7[%c4] : memref<98xf32, #tpu.memory_space<smem>>
    %288 = vector.broadcast %287 : f32 to vector<2x256xf32>
    %289 = arith.mulf %288, %283 : vector<2x256xf32>
    %c53 = arith.constant 53 : index
    %290 = memref.load %arg7[%c53] : memref<98xf32, #tpu.memory_space<smem>>
    %291 = vector.broadcast %290 : f32 to vector<2x256xf32>
    %292 = arith.mulf %291, %286 : vector<2x256xf32>
    %293 = arith.addf %289, %292 : vector<2x256xf32>
    %294 = arith.addf %229, %293 : vector<2x256xf32>
    %c11 = arith.constant 11 : index
    %295 = memref.load %arg7[%c11] : memref<98xf32, #tpu.memory_space<smem>>
    %296 = vector.broadcast %295 : f32 to vector<2x256xf32>
    %297 = arith.mulf %296, %283 : vector<2x256xf32>
    %c60 = arith.constant 60 : index
    %298 = memref.load %arg7[%c60] : memref<98xf32, #tpu.memory_space<smem>>
    %299 = vector.broadcast %298 : f32 to vector<2x256xf32>
    %300 = arith.mulf %299, %286 : vector<2x256xf32>
    %301 = arith.addf %297, %300 : vector<2x256xf32>
    %302 = arith.addf %237, %301 : vector<2x256xf32>
    %c18 = arith.constant 18 : index
    %303 = memref.load %arg7[%c18] : memref<98xf32, #tpu.memory_space<smem>>
    %304 = vector.broadcast %303 : f32 to vector<2x256xf32>
    %305 = arith.mulf %304, %283 : vector<2x256xf32>
    %c67 = arith.constant 67 : index
    %306 = memref.load %arg7[%c67] : memref<98xf32, #tpu.memory_space<smem>>
    %307 = vector.broadcast %306 : f32 to vector<2x256xf32>
    %308 = arith.mulf %307, %286 : vector<2x256xf32>
    %309 = arith.addf %305, %308 : vector<2x256xf32>
    %310 = arith.addf %245, %309 : vector<2x256xf32>
    %c25 = arith.constant 25 : index
    %311 = memref.load %arg7[%c25] : memref<98xf32, #tpu.memory_space<smem>>
    %312 = vector.broadcast %311 : f32 to vector<2x256xf32>
    %313 = arith.mulf %312, %283 : vector<2x256xf32>
    %c74 = arith.constant 74 : index
    %314 = memref.load %arg7[%c74] : memref<98xf32, #tpu.memory_space<smem>>
    %315 = vector.broadcast %314 : f32 to vector<2x256xf32>
    %316 = arith.mulf %315, %286 : vector<2x256xf32>
    %317 = arith.addf %313, %316 : vector<2x256xf32>
    %318 = arith.addf %253, %317 : vector<2x256xf32>
    %c32 = arith.constant 32 : index
    %319 = memref.load %arg7[%c32] : memref<98xf32, #tpu.memory_space<smem>>
    %320 = vector.broadcast %319 : f32 to vector<2x256xf32>
    %321 = arith.mulf %320, %283 : vector<2x256xf32>
    %c81 = arith.constant 81 : index
    %322 = memref.load %arg7[%c81] : memref<98xf32, #tpu.memory_space<smem>>
    %323 = vector.broadcast %322 : f32 to vector<2x256xf32>
    %324 = arith.mulf %323, %286 : vector<2x256xf32>
    %325 = arith.addf %321, %324 : vector<2x256xf32>
    %326 = arith.addf %261, %325 : vector<2x256xf32>
    %c39 = arith.constant 39 : index
    %327 = memref.load %arg7[%c39] : memref<98xf32, #tpu.memory_space<smem>>
    %328 = vector.broadcast %327 : f32 to vector<2x256xf32>
    %329 = arith.mulf %328, %283 : vector<2x256xf32>
    %c88 = arith.constant 88 : index
    %330 = memref.load %arg7[%c88] : memref<98xf32, #tpu.memory_space<smem>>
    %331 = vector.broadcast %330 : f32 to vector<2x256xf32>
    %332 = arith.mulf %331, %286 : vector<2x256xf32>
    %333 = arith.addf %329, %332 : vector<2x256xf32>
    %334 = arith.addf %269, %333 : vector<2x256xf32>
    %c46 = arith.constant 46 : index
    %335 = memref.load %arg7[%c46] : memref<98xf32, #tpu.memory_space<smem>>
    %336 = vector.broadcast %335 : f32 to vector<2x256xf32>
    %337 = arith.mulf %336, %283 : vector<2x256xf32>
    %c95 = arith.constant 95 : index
    %338 = memref.load %arg7[%c95] : memref<98xf32, #tpu.memory_space<smem>>
    %339 = vector.broadcast %338 : f32 to vector<2x256xf32>
    %340 = arith.mulf %339, %286 : vector<2x256xf32>
    %341 = arith.addf %337, %340 : vector<2x256xf32>
    %342 = arith.addf %277, %341 : vector<2x256xf32>
    %343 = vector.extract_strided_slice %33 {offsets = [4, 0], sizes = [1, 256], strides = [1, 1]} : vector<12x256xf32> to vector<1x256xf32>
    %344 = vector.shape_cast %343 : vector<1x256xf32> to vector<256xf32>
    %345 = vector.shape_cast %344 : vector<256xf32> to vector<1x256xf32>
    %c254_i32 = arith.constant 254 : i32
    %346 = tpu.dynamic_rotate %29 by %c254_i32 dim 1 : vector<2x256xf32>, i32 -> vector<2x256xf32>
    %347 = vector.broadcast %345 : vector<1x256xf32> to vector<2x256xf32>
    %348 = arith.mulf %346, %347 : vector<2x256xf32>
    %c254_i32_26 = arith.constant 254 : i32
    %349 = tpu.dynamic_rotate %32 by %c254_i32_26 dim 1 : vector<2x256xf32>, i32 -> vector<2x256xf32>
    %350 = vector.broadcast %345 : vector<1x256xf32> to vector<2x256xf32>
    %351 = arith.mulf %349, %350 : vector<2x256xf32>
    %c5 = arith.constant 5 : index
    %352 = memref.load %arg7[%c5] : memref<98xf32, #tpu.memory_space<smem>>
    %353 = vector.broadcast %352 : f32 to vector<2x256xf32>
    %354 = arith.mulf %353, %348 : vector<2x256xf32>
    %c54 = arith.constant 54 : index
    %355 = memref.load %arg7[%c54] : memref<98xf32, #tpu.memory_space<smem>>
    %356 = vector.broadcast %355 : f32 to vector<2x256xf32>
    %357 = arith.mulf %356, %351 : vector<2x256xf32>
    %358 = arith.addf %354, %357 : vector<2x256xf32>
    %359 = arith.addf %294, %358 : vector<2x256xf32>
    %c12 = arith.constant 12 : index
    %360 = memref.load %arg7[%c12] : memref<98xf32, #tpu.memory_space<smem>>
    %361 = vector.broadcast %360 : f32 to vector<2x256xf32>
    %362 = arith.mulf %361, %348 : vector<2x256xf32>
    %c61 = arith.constant 61 : index
    %363 = memref.load %arg7[%c61] : memref<98xf32, #tpu.memory_space<smem>>
    %364 = vector.broadcast %363 : f32 to vector<2x256xf32>
    %365 = arith.mulf %364, %351 : vector<2x256xf32>
    %366 = arith.addf %362, %365 : vector<2x256xf32>
    %367 = arith.addf %302, %366 : vector<2x256xf32>
    %c19 = arith.constant 19 : index
    %368 = memref.load %arg7[%c19] : memref<98xf32, #tpu.memory_space<smem>>
    %369 = vector.broadcast %368 : f32 to vector<2x256xf32>
    %370 = arith.mulf %369, %348 : vector<2x256xf32>
    %c68 = arith.constant 68 : index
    %371 = memref.load %arg7[%c68] : memref<98xf32, #tpu.memory_space<smem>>
    %372 = vector.broadcast %371 : f32 to vector<2x256xf32>
    %373 = arith.mulf %372, %351 : vector<2x256xf32>
    %374 = arith.addf %370, %373 : vector<2x256xf32>
    %375 = arith.addf %310, %374 : vector<2x256xf32>
    %c26 = arith.constant 26 : index
    %376 = memref.load %arg7[%c26] : memref<98xf32, #tpu.memory_space<smem>>
    %377 = vector.broadcast %376 : f32 to vector<2x256xf32>
    %378 = arith.mulf %377, %348 : vector<2x256xf32>
    %c75 = arith.constant 75 : index
    %379 = memref.load %arg7[%c75] : memref<98xf32, #tpu.memory_space<smem>>
    %380 = vector.broadcast %379 : f32 to vector<2x256xf32>
    %381 = arith.mulf %380, %351 : vector<2x256xf32>
    %382 = arith.addf %378, %381 : vector<2x256xf32>
    %383 = arith.addf %318, %382 : vector<2x256xf32>
    %c33 = arith.constant 33 : index
    %384 = memref.load %arg7[%c33] : memref<98xf32, #tpu.memory_space<smem>>
    %385 = vector.broadcast %384 : f32 to vector<2x256xf32>
    %386 = arith.mulf %385, %348 : vector<2x256xf32>
    %c82 = arith.constant 82 : index
    %387 = memref.load %arg7[%c82] : memref<98xf32, #tpu.memory_space<smem>>
    %388 = vector.broadcast %387 : f32 to vector<2x256xf32>
    %389 = arith.mulf %388, %351 : vector<2x256xf32>
    %390 = arith.addf %386, %389 : vector<2x256xf32>
    %391 = arith.addf %326, %390 : vector<2x256xf32>
    %c40 = arith.constant 40 : index
    %392 = memref.load %arg7[%c40] : memref<98xf32, #tpu.memory_space<smem>>
    %393 = vector.broadcast %392 : f32 to vector<2x256xf32>
    %394 = arith.mulf %393, %348 : vector<2x256xf32>
    %c89 = arith.constant 89 : index
    %395 = memref.load %arg7[%c89] : memref<98xf32, #tpu.memory_space<smem>>
    %396 = vector.broadcast %395 : f32 to vector<2x256xf32>
    %397 = arith.mulf %396, %351 : vector<2x256xf32>
    %398 = arith.addf %394, %397 : vector<2x256xf32>
    %399 = arith.addf %334, %398 : vector<2x256xf32>
    %c47 = arith.constant 47 : index
    %400 = memref.load %arg7[%c47] : memref<98xf32, #tpu.memory_space<smem>>
    %401 = vector.broadcast %400 : f32 to vector<2x256xf32>
    %402 = arith.mulf %401, %348 : vector<2x256xf32>
    %c96 = arith.constant 96 : index
    %403 = memref.load %arg7[%c96] : memref<98xf32, #tpu.memory_space<smem>>
    %404 = vector.broadcast %403 : f32 to vector<2x256xf32>
    %405 = arith.mulf %404, %351 : vector<2x256xf32>
    %406 = arith.addf %402, %405 : vector<2x256xf32>
    %407 = arith.addf %342, %406 : vector<2x256xf32>
    %408 = vector.extract_strided_slice %33 {offsets = [5, 0], sizes = [1, 256], strides = [1, 1]} : vector<12x256xf32> to vector<1x256xf32>
    %409 = vector.shape_cast %408 : vector<1x256xf32> to vector<256xf32>
    %410 = vector.shape_cast %409 : vector<256xf32> to vector<1x256xf32>
    %c253_i32 = arith.constant 253 : i32
    %411 = tpu.dynamic_rotate %29 by %c253_i32 dim 1 : vector<2x256xf32>, i32 -> vector<2x256xf32>
    %412 = vector.broadcast %410 : vector<1x256xf32> to vector<2x256xf32>
    %413 = arith.mulf %411, %412 : vector<2x256xf32>
    %c253_i32_27 = arith.constant 253 : i32
    %414 = tpu.dynamic_rotate %32 by %c253_i32_27 dim 1 : vector<2x256xf32>, i32 -> vector<2x256xf32>
    %415 = vector.broadcast %410 : vector<1x256xf32> to vector<2x256xf32>
    %416 = arith.mulf %414, %415 : vector<2x256xf32>
    %c6 = arith.constant 6 : index
    %417 = memref.load %arg7[%c6] : memref<98xf32, #tpu.memory_space<smem>>
    %418 = vector.broadcast %417 : f32 to vector<2x256xf32>
    %419 = arith.mulf %418, %413 : vector<2x256xf32>
    %c55 = arith.constant 55 : index
    %420 = memref.load %arg7[%c55] : memref<98xf32, #tpu.memory_space<smem>>
    %421 = vector.broadcast %420 : f32 to vector<2x256xf32>
    %422 = arith.mulf %421, %416 : vector<2x256xf32>
    %423 = arith.addf %419, %422 : vector<2x256xf32>
    %424 = arith.addf %359, %423 : vector<2x256xf32>
    %c13 = arith.constant 13 : index
    %425 = memref.load %arg7[%c13] : memref<98xf32, #tpu.memory_space<smem>>
    %426 = vector.broadcast %425 : f32 to vector<2x256xf32>
    %427 = arith.mulf %426, %413 : vector<2x256xf32>
    %c62 = arith.constant 62 : index
    %428 = memref.load %arg7[%c62] : memref<98xf32, #tpu.memory_space<smem>>
    %429 = vector.broadcast %428 : f32 to vector<2x256xf32>
    %430 = arith.mulf %429, %416 : vector<2x256xf32>
    %431 = arith.addf %427, %430 : vector<2x256xf32>
    %432 = arith.addf %367, %431 : vector<2x256xf32>
    %c20 = arith.constant 20 : index
    %433 = memref.load %arg7[%c20] : memref<98xf32, #tpu.memory_space<smem>>
    %434 = vector.broadcast %433 : f32 to vector<2x256xf32>
    %435 = arith.mulf %434, %413 : vector<2x256xf32>
    %c69 = arith.constant 69 : index
    %436 = memref.load %arg7[%c69] : memref<98xf32, #tpu.memory_space<smem>>
    %437 = vector.broadcast %436 : f32 to vector<2x256xf32>
    %438 = arith.mulf %437, %416 : vector<2x256xf32>
    %439 = arith.addf %435, %438 : vector<2x256xf32>
    %440 = arith.addf %375, %439 : vector<2x256xf32>
    %c27 = arith.constant 27 : index
    %441 = memref.load %arg7[%c27] : memref<98xf32, #tpu.memory_space<smem>>
    %442 = vector.broadcast %441 : f32 to vector<2x256xf32>
    %443 = arith.mulf %442, %413 : vector<2x256xf32>
    %c76 = arith.constant 76 : index
    %444 = memref.load %arg7[%c76] : memref<98xf32, #tpu.memory_space<smem>>
    %445 = vector.broadcast %444 : f32 to vector<2x256xf32>
    %446 = arith.mulf %445, %416 : vector<2x256xf32>
    %447 = arith.addf %443, %446 : vector<2x256xf32>
    %448 = arith.addf %383, %447 : vector<2x256xf32>
    %c34 = arith.constant 34 : index
    %449 = memref.load %arg7[%c34] : memref<98xf32, #tpu.memory_space<smem>>
    %450 = vector.broadcast %449 : f32 to vector<2x256xf32>
    %451 = arith.mulf %450, %413 : vector<2x256xf32>
    %c83 = arith.constant 83 : index
    %452 = memref.load %arg7[%c83] : memref<98xf32, #tpu.memory_space<smem>>
    %453 = vector.broadcast %452 : f32 to vector<2x256xf32>
    %454 = arith.mulf %453, %416 : vector<2x256xf32>
    %455 = arith.addf %451, %454 : vector<2x256xf32>
    %456 = arith.addf %391, %455 : vector<2x256xf32>
    %c41 = arith.constant 41 : index
    %457 = memref.load %arg7[%c41] : memref<98xf32, #tpu.memory_space<smem>>
    %458 = vector.broadcast %457 : f32 to vector<2x256xf32>
    %459 = arith.mulf %458, %413 : vector<2x256xf32>
    %c90 = arith.constant 90 : index
    %460 = memref.load %arg7[%c90] : memref<98xf32, #tpu.memory_space<smem>>
    %461 = vector.broadcast %460 : f32 to vector<2x256xf32>
    %462 = arith.mulf %461, %416 : vector<2x256xf32>
    %463 = arith.addf %459, %462 : vector<2x256xf32>
    %464 = arith.addf %399, %463 : vector<2x256xf32>
    %c48 = arith.constant 48 : index
    %465 = memref.load %arg7[%c48] : memref<98xf32, #tpu.memory_space<smem>>
    %466 = vector.broadcast %465 : f32 to vector<2x256xf32>
    %467 = arith.mulf %466, %413 : vector<2x256xf32>
    %c97 = arith.constant 97 : index
    %468 = memref.load %arg7[%c97] : memref<98xf32, #tpu.memory_space<smem>>
    %469 = vector.broadcast %468 : f32 to vector<2x256xf32>
    %470 = arith.mulf %469, %416 : vector<2x256xf32>
    %471 = arith.addf %467, %470 : vector<2x256xf32>
    %472 = arith.addf %407, %471 : vector<2x256xf32>
    %c48_i32 = arith.constant 48 : i32
    %473 = tpu.dynamic_rotate %424 by %c48_i32 dim 1 : vector<2x256xf32>, i32 -> vector<2x256xf32>
    %474 = vector.extract_strided_slice %33 {offsets = [6, 0], sizes = [1, 256], strides = [1, 1]} : vector<12x256xf32> to vector<1x256xf32>
    %475 = vector.shape_cast %474 : vector<1x256xf32> to vector<256xf32>
    %476 = vector.shape_cast %475 : vector<256xf32> to vector<1x256xf32>
    %477 = vector.broadcast %476 : vector<1x256xf32> to vector<2x256xf32>
    %478 = arith.mulf %473, %477 : vector<2x256xf32>
    %c32_i32 = arith.constant 32 : i32
    %479 = tpu.dynamic_rotate %432 by %c32_i32 dim 1 : vector<2x256xf32>, i32 -> vector<2x256xf32>
    %480 = vector.extract_strided_slice %33 {offsets = [7, 0], sizes = [1, 256], strides = [1, 1]} : vector<12x256xf32> to vector<1x256xf32>
    %481 = vector.shape_cast %480 : vector<1x256xf32> to vector<256xf32>
    %482 = vector.shape_cast %481 : vector<256xf32> to vector<1x256xf32>
    %483 = vector.broadcast %482 : vector<1x256xf32> to vector<2x256xf32>
    %484 = arith.mulf %479, %483 : vector<2x256xf32>
    %485 = arith.addf %478, %484 : vector<2x256xf32>
    %c16_i32 = arith.constant 16 : i32
    %486 = tpu.dynamic_rotate %440 by %c16_i32 dim 1 : vector<2x256xf32>, i32 -> vector<2x256xf32>
    %487 = vector.extract_strided_slice %33 {offsets = [8, 0], sizes = [1, 256], strides = [1, 1]} : vector<12x256xf32> to vector<1x256xf32>
    %488 = vector.shape_cast %487 : vector<1x256xf32> to vector<256xf32>
    %489 = vector.shape_cast %488 : vector<256xf32> to vector<1x256xf32>
    %490 = vector.broadcast %489 : vector<1x256xf32> to vector<2x256xf32>
    %491 = arith.mulf %486, %490 : vector<2x256xf32>
    %492 = arith.addf %485, %491 : vector<2x256xf32>
    %493 = arith.addf %492, %448 : vector<2x256xf32>
    %c240_i32 = arith.constant 240 : i32
    %494 = tpu.dynamic_rotate %456 by %c240_i32 dim 1 : vector<2x256xf32>, i32 -> vector<2x256xf32>
    %495 = vector.extract_strided_slice %33 {offsets = [9, 0], sizes = [1, 256], strides = [1, 1]} : vector<12x256xf32> to vector<1x256xf32>
    %496 = vector.shape_cast %495 : vector<1x256xf32> to vector<256xf32>
    %497 = vector.shape_cast %496 : vector<256xf32> to vector<1x256xf32>
    %498 = vector.broadcast %497 : vector<1x256xf32> to vector<2x256xf32>
    %499 = arith.mulf %494, %498 : vector<2x256xf32>
    %500 = arith.addf %493, %499 : vector<2x256xf32>
    %c224_i32 = arith.constant 224 : i32
    %501 = tpu.dynamic_rotate %464 by %c224_i32 dim 1 : vector<2x256xf32>, i32 -> vector<2x256xf32>
    %502 = vector.extract_strided_slice %33 {offsets = [10, 0], sizes = [1, 256], strides = [1, 1]} : vector<12x256xf32> to vector<1x256xf32>
    %503 = vector.shape_cast %502 : vector<1x256xf32> to vector<256xf32>
    %504 = vector.shape_cast %503 : vector<256xf32> to vector<1x256xf32>
    %505 = vector.broadcast %504 : vector<1x256xf32> to vector<2x256xf32>
    %506 = arith.mulf %501, %505 : vector<2x256xf32>
    %507 = arith.addf %500, %506 : vector<2x256xf32>
    %c208_i32 = arith.constant 208 : i32
    %508 = tpu.dynamic_rotate %472 by %c208_i32 dim 1 : vector<2x256xf32>, i32 -> vector<2x256xf32>
    %509 = vector.extract_strided_slice %33 {offsets = [11, 0], sizes = [1, 256], strides = [1, 1]} : vector<12x256xf32> to vector<1x256xf32>
    %510 = vector.shape_cast %509 : vector<1x256xf32> to vector<256xf32>
    %511 = vector.shape_cast %510 : vector<256xf32> to vector<1x256xf32>
    %512 = vector.broadcast %511 : vector<1x256xf32> to vector<2x256xf32>
    %513 = arith.mulf %508, %512 : vector<2x256xf32>
    %514 = arith.addf %507, %513 : vector<2x256xf32>
    %c0_28 = arith.constant 0 : index
    %515 = memref.load %arg8[%c0_28] : memref<2xf32, #tpu.memory_space<smem>>
    %516 = vector.broadcast %515 : f32 to vector<2x256xf32>
    %517 = arith.mulf %514, %516 : vector<2x256xf32>
    %c1_29 = arith.constant 1 : index
    %518 = memref.load %arg8[%c1_29] : memref<2xf32, #tpu.memory_space<smem>>
    %519 = vector.broadcast %518 : f32 to vector<2x256xf32>
    %520 = arith.addf %517, %519 : vector<2x256xf32>
    %521 = arith.negf %520 : vector<2x256xf32>
    %522 = math.exp %521 : vector<2x256xf32>
    %cst_30 = arith.constant 1.000000e+00 : f32
    %523 = vector.broadcast %cst_30 : f32 to vector<2x256xf32>
    %524 = arith.addf %523, %522 : vector<2x256xf32>
    %525 = arith.divf %523, %524 : vector<2x256xf32>
    %526 = vector.shape_cast %525 : vector<2x256xf32> to vector<2x1x256xf32>
    %527 = vector.broadcast %526 : vector<2x1x256xf32> to vector<2x32x256xf32>
    %528 = arith.mulf %28, %527 : vector<2x32x256xf32>
    %c0_31 = arith.constant 0 : index
    %c0_32 = arith.constant 0 : index
    %c0_33 = arith.constant 0 : index
    %529 = vector.load %arg9[%c0_31, %c0_32, %c0_33] : memref<2x32x256xf32, #tpu.memory_space<vmem>>, vector<2x32x256xf32>
    tpu.vector_store %arg9[%c0_31, %c0_32, %c0_33], %528 {strides = array<i32>} : memref<2x32x256xf32, #tpu.memory_space<vmem>>, vector<2x32x256xf32>,
    return
  }
  func.func @transform_0(%arg0: i32) -> (i32, i32, i32) {
    %c0_i32 = arith.constant 0 : i32
    %c0_i32_0 = arith.constant 0 : i32
    %c0_i32_1 = arith.constant 0 : i32
    return %arg0, %c0_i32, %c0_i32_0 : i32, i32, i32
  }
  func.func @transform_1(%arg0: i32) -> (i32, i32) {
    %c0_i32 = arith.constant 0 : i32
    %c0_i32_0 = arith.constant 0 : i32
    %c0_i32_1 = arith.constant 0 : i32
    return %c0_i32, %c0_i32_0 : i32, i32
  }
  func.func @transform_2(%arg0: i32) -> (i32, i32) {
    %c0_i32 = arith.constant 0 : i32
    %c0_i32_0 = arith.constant 0 : i32
    %c0_i32_1 = arith.constant 0 : i32
    return %c0_i32, %c0_i32_0 : i32, i32
  }
  func.func @transform_3(%arg0: i32) -> (i32, i32) {
    %c0_i32 = arith.constant 0 : i32
    %c0_i32_0 = arith.constant 0 : i32
    %c0_i32_1 = arith.constant 0 : i32
    return %c0_i32, %c0_i32_0 : i32, i32
  }
  func.func @transform_4(%arg0: i32) -> (i32, i32) {
    %c0_i32 = arith.constant 0 : i32
    %c0_i32_0 = arith.constant 0 : i32
    %c0_i32_1 = arith.constant 0 : i32
    return %c0_i32, %c0_i32_0 : i32, i32
  }
  func.func @transform_5(%arg0: i32) -> (i32, i32) {
    %c0_i32 = arith.constant 0 : i32
    %c0_i32_0 = arith.constant 0 : i32
    %c0_i32_1 = arith.constant 0 : i32
    return %c0_i32, %c0_i32_0 : i32, i32
  }
  func.func @transform_6(%arg0: i32) -> i32 {
    %c0_i32 = arith.constant 0 : i32
    %c0_i32_0 = arith.constant 0 : i32
    return %c0_i32 : i32
  }
  func.func @transform_7(%arg0: i32) -> i32 {
    %c0_i32 = arith.constant 0 : i32
    %c0_i32_0 = arith.constant 0 : i32
    return %c0_i32 : i32
  }
  func.func @transform_8(%arg0: i32) -> (i32, i32, i32) {
    %c0_i32 = arith.constant 0 : i32
    %c0_i32_0 = arith.constant 0 : i32
    %c0_i32_1 = arith.constant 0 : i32
    return %arg0, %c0_i32, %c0_i32_0 : i32, i32, i32
  }
}

</mosaic_0001>

<llo_original>
// kernel: tpu_custom_call.1
$region0: #{tpu_custom_call.1}
  #allocation0 [shape = 'u32[]', space=smem, size = 0x4, offset = 0x4, fixed_abs, tag = 'smem constant byte address 0x4 - core index']
  #allocation1 [shape = 'u32[72,128]{1,0:T(1,128)}', space=vmem, size = 0x9000, scoped, tag = 'internal scratch']
  %s0 = inlined_call_operand.hbm [shape: f32[4,32,256], index: 0, kind: input, shape index: {}]
  %s1 = inlined_call_operand.vmem [shape: f32[32,2], index: 1, kind: input, shape index: {}]
  %s2 = inlined_call_operand.vmem [shape: f32[1,2], index: 2, kind: input, shape index: {}]
  %s3 = inlined_call_operand.vmem [shape: f32[2,32], index: 3, kind: input, shape index: {}]
  %s4 = inlined_call_operand.vmem [shape: f32[1,32], index: 4, kind: input, shape index: {}]
  %s5 = inlined_call_operand.vmem [shape: f32[12,256], index: 5, kind: input, shape index: {}]
  %s6 = inlined_call_operand.vmem [shape: f32[98], index: 6, kind: input, shape index: {}]
  %s7 = inlined_call_operand.vmem [shape: f32[2], index: 7, kind: input, shape index: {}]
  %s8 = inlined_call_operand.hbm [shape: f32[4,32,256], index: 8, kind: output, shape index: {}]
  %s9 = sld [smem:[#allocation0]]
  $region77: #{tpu_custom_call.1} parent=0
    _
  %s11 = ssub.s32 1, %s9
  %s12 = scalar_select 0, %s11, %s9
  $region1: #{tpu_custom_call.1} parent=0
    #allocation2 [shape = 'u8[131072]{0}', space=vmem, size = 0x20000, scoped, tag = 'input window, operand 0']
    #allocation3 [shape = 's32[2]{0}', space=sflag, size = 0x8, scoped, tag = 'scoped memory for tpu_custom_call.1']
    #allocation4 [shape = 's32[2]{0}', space=sflag, size = 0x8, scoped, tag = 'scoped memory for tpu_custom_call.1']
    #allocation5 [shape = 's32[2]{0}', space=sflag, size = 0x8, scoped, tag = 'scoped memory for tpu_custom_call.1']
    #allocation6 [shape = 'u8[512]{0}', space=smem, size = 0x200, scoped, tag = 'input window, operand 6, single buffered']
    #allocation7 [shape = 'u8[512]{0}', space=smem, size = 0x200, scoped, tag = 'input window, operand 7, single buffered']
    #allocation8 [shape = 's32[1]{0}', space=sflag, size = 0x4, scoped, tag = 'scoped memory for tpu_custom_call.1']
    #allocation9 [shape = 'u8[131072]{0}', space=vmem, size = 0x20000, scoped, tag = 'output window, operand 0']
    %13 = vsyncpa [#allocation3], 0
    %s14 = scalar_lea.sflag [#allocation3], 1
    %15 = vsyncpa %s14, 0
    %16 = vsyncpa [#allocation5], 0
    %17 = vsyncpa [#allocation8], 0
    %18 = vsyncpa [#allocation4], 0
    %s19 = scalar_lea.sflag [#allocation4], 1
    %20 = vsyncpa %s19, 0
    loop: start=0, step=1, limit=4
    $region2: #{tpu_custom_call.1} parent=1 // loop_pre_header
      _
    $region3: #{tpu_custom_call.1} parent=1 // loop_header
      %s22 = sphi 0, %s26
      %p23 = scmp.ge.s32.totalorder %s22, 4
      %s32 = sphi 0, %s34
      %s35 = sphi 0, %s32
      %s36 = sphi 0, %s35
      %s52 = sphi 0, %s36
      %s56 = sphi 0, %s56
      %s58 = sphi 0, %s56
      %s59 = sphi 0, %s58
      %s73 = sphi 0, %s59
      %s77 = sphi 0, %s77
      %s79 = sphi 0, %s77
      %s80 = sphi 0, %s79
      %s94 = sphi 0, %s80
      %s98 = sphi 0, %s98
      %s100 = sphi 0, %s98
      %s101 = sphi 0, %s100
      %s115 = sphi 0, %s101
      %s119 = sphi 0, %s119
      %s121 = sphi 0, %s119
      %s122 = sphi 0, %s121
      %s136 = sphi 0, %s122
      %s140 = sphi 0, %s140
      %s142 = sphi 0, %s140
      %s143 = sphi 0, %s142
      %s157 = sphi 0, %s143
      %s161 = sphi 0, %s161
      %s163 = sphi 0, %s161
      %s164 = sphi 0, %s163
      %s178 = sphi 0, %s164
      %s182 = sphi 0, %s182
      %s184 = sphi 0, %s182
      %s185 = sphi 0, %s184
      %s199 = sphi 0, %s185
      %s205 = sphi 0, %s207
      %s208 = sphi 0, %s205
      %s209 = sphi 0, %s208
      %s225 = sphi 0, %s209
    $region4: #{tpu_custom_call.1} parent=1 // loop_header_branch
      %25 = sbr.rel (%p23) target = $region8
    $region5: #{tpu_custom_call.1} parent=1 // loop_body
      %s27 = ssub.s32 %s22, 1
      %s28 = ssub.s32 %s22, 2
      %s29 = sadd.s32 %s22, 1
      %s30 = ssub.s32 %s22, %s29
      %p31 = scmp.eq.s32.totalorder %s30, 0
      %s33 = sadd.s32 %s32, 1
      %s34 = scalar_select %p31, %s32, %s33
      %p37 = pneg %p31
      %p38 = scmp.eq.s32.totalorder %s22, 1
      %p39 = por %p37, %p38
      %p40 = scmp.ne.s32.totalorder %s32, %s35
      %p41 = scmp.eq.s32.totalorder %s22, 0
      %p42 = por %p40, %p41
      %p43 = scmp.ne.s32.totalorder %s32, %s35
      %p44 = scmp.eq.s32.totalorder %s27, 1
      %p45 = por %p43, %p44
      %p46 = scmp.ne.s32.totalorder %s35, %s36
      %p47 = scmp.eq.s32.totalorder %s27, 0
      %p48 = por %p46, %p47
      %p49 = scmp.ne.s32.totalorder %s35, %s36
      %p50 = scmp.eq.s32.totalorder %s28, 1
      %p51 = por %p49, %p50
      %p53 = scmp.ne.s32.totalorder %s36, %s52
      %p54 = scmp.eq.s32.totalorder %s28, 0
      %p55 = por %p53, %p54
      %s57 = sadd.s32 %s56, 1
      %p60 = scmp.eq.s32.totalorder %s22, 1
      %p61 = scmp.ne.s32.totalorder %s56, %s58
      %p62 = scmp.eq.s32.totalorder %s22, 0
      %p63 = por %p61, %p62
      %p64 = scmp.ne.s32.totalorder %s56, %s58
      %p65 = scmp.eq.s32.totalorder %s27, 1
      %p66 = por %p64, %p65
      %p67 = scmp.ne.s32.totalorder %s58, %s59
      %p68 = scmp.eq.s32.totalorder %s27, 0
      %p69 = por %p67, %p68
      %p70 = scmp.ne.s32.totalorder %s58, %s59
      %p71 = scmp.eq.s32.totalorder %s28, 1
      %p72 = por %p70, %p71
      %p74 = scmp.ne.s32.totalorder %s59, %s73
      %p75 = scmp.eq.s32.totalorder %s28, 0
      %p76 = por %p74, %p75
      %s78 = sadd.s32 %s77, 1
      %p81 = scmp.eq.s32.totalorder %s22, 1
      %p82 = scmp.ne.s32.totalorder %s77, %s79
      %p83 = scmp.eq.s32.totalorder %s22, 0
      %p84 = por %p82, %p83
      %p85 = scmp.ne.s32.totalorder %s77, %s79
      %p86 = scmp.eq.s32.totalorder %s27, 1
      %p87 = por %p85, %p86
      %p88 = scmp.ne.s32.totalorder %s79, %s80
      %p89 = scmp.eq.s32.totalorder %s27, 0
      %p90 = por %p88, %p89
      %p91 = scmp.ne.s32.totalorder %s79, %s80
      %p92 = scmp.eq.s32.totalorder %s28, 1
      %p93 = por %p91, %p92
      %p95 = scmp.ne.s32.totalorder %s80, %s94
      %p96 = scmp.eq.s32.totalorder %s28, 0
      %p97 = por %p95, %p96
      %s99 = sadd.s32 %s98, 1
      %p102 = scmp.eq.s32.totalorder %s22, 1
      %p103 = scmp.ne.s32.totalorder %s98, %s100
      %p104 = scmp.eq.s32.totalorder %s22, 0
      %p105 = por %p103, %p104
      %p106 = scmp.ne.s32.totalorder %s98, %s100
      %p107 = scmp.eq.s32.totalorder %s27, 1
      %p108 = por %p106, %p107
      %p109 = scmp.ne.s32.totalorder %s100, %s101
      %p110 = scmp.eq.s32.totalorder %s27, 0
      %p111 = por %p109, %p110
      %p112 = scmp.ne.s32.totalorder %s100, %s101
      %p113 = scmp.eq.s32.totalorder %s28, 1
      %p114 = por %p112, %p113
      %p116 = scmp.ne.s32.totalorder %s101, %s115
      %p117 = scmp.eq.s32.totalorder %s28, 0
      %p118 = por %p116, %p117
      %s120 = sadd.s32 %s119, 1
      %p123 = scmp.eq.s32.totalorder %s22, 1
      %p124 = scmp.ne.s32.totalorder %s119, %s121
      %p125 = scmp.eq.s32.totalorder %s22, 0
      %p126 = por %p124, %p125
      %p127 = scmp.ne.s32.totalorder %s119, %s121
      %p128 = scmp.eq.s32.totalorder %s27, 1
      %p129 = por %p127, %p128
      %p130 = scmp.ne.s32.totalorder %s121, %s122
      %p131 = scmp.eq.s32.totalorder %s27, 0
      %p132 = por %p130, %p131
      %p133 = scmp.ne.s32.totalorder %s121, %s122
      %p134 = scmp.eq.s32.totalorder %s28, 1
      %p135 = por %p133, %p134
      %p137 = scmp.ne.s32.totalorder %s122, %s136
      %p138 = scmp.eq.s32.totalorder %s28, 0
      %p139 = por %p137, %p138
      %s141 = sadd.s32 %s140, 1
      %p144 = scmp.eq.s32.totalorder %s22, 1
      %p145 = scmp.ne.s32.totalorder %s140, %s142
      %p146 = scmp.eq.s32.totalorder %s22, 0
      %p147 = por %p145, %p146
      %p148 = scmp.ne.s32.totalorder %s140, %s142
      %p149 = scmp.eq.s32.totalorder %s27, 1
      %p150 = por %p148, %p149
      %p151 = scmp.ne.s32.totalorder %s142, %s143
      %p152 = scmp.eq.s32.totalorder %s27, 0
      %p153 = por %p151, %p152
      %p154 = scmp.ne.s32.totalorder %s142, %s143
      %p155 = scmp.eq.s32.totalorder %s28, 1
      %p156 = por %p154, %p155
      %p158 = scmp.ne.s32.totalorder %s143, %s157
      %p159 = scmp.eq.s32.totalorder %s28, 0
      %p160 = por %p158, %p159
      %s162 = sadd.s32 %s161, 1
      %p165 = scmp.eq.s32.totalorder %s22, 1
      %p166 = scmp.ne.s32.totalorder %s161, %s163
      %p167 = scmp.eq.s32.totalorder %s22, 0
      %p168 = por %p166, %p167
      %p169 = scmp.ne.s32.totalorder %s161, %s163
      %p170 = scmp.eq.s32.totalorder %s27, 1
      %p171 = por %p169, %p170
      %p172 = scmp.ne.s32.totalorder %s163, %s164
      %p173 = scmp.eq.s32.totalorder %s27, 0
      %p174 = por %p172, %p173
      %p175 = scmp.ne.s32.totalorder %s163, %s164
      %p176 = scmp.eq.s32.totalorder %s28, 1
      %p177 = por %p175, %p176
      %p179 = scmp.ne.s32.totalorder %s164, %s178
      %p180 = scmp.eq.s32.totalorder %s28, 0
      %p181 = por %p179, %p180
      %s183 = sadd.s32 %s182, 1
      %p186 = scmp.eq.s32.totalorder %s22, 1
      %p187 = scmp.ne.s32.totalorder %s182, %s184
      %p188 = scmp.eq.s32.totalorder %s22, 0
      %p189 = por %p187, %p188
      %p190 = scmp.ne.s32.totalorder %s182, %s184
      %p191 = scmp.eq.s32.totalorder %s27, 1
      %p192 = por %p190, %p191
      %p193 = scmp.ne.s32.totalorder %s184, %s185
      %p194 = scmp.eq.s32.totalorder %s27, 0
      %p195 = por %p193, %p194
      %p196 = scmp.ne.s32.totalorder %s184, %s185
      %p197 = scmp.eq.s32.totalorder %s28, 1
      %p198 = por %p196, %p197
      %p200 = scmp.ne.s32.totalorder %s185, %s199
      %p201 = scmp.eq.s32.totalorder %s28, 0
      %p202 = por %p200, %p201
      %s203 = ssub.s32 %s22, %s29
      %p204 = scmp.eq.s32.totalorder %s203, 0
      %s206 = sadd.s32 %s205, 1
      %s207 = scalar_select %p204, %s205, %s206
      %p210 = pneg %p204
      %p211 = scmp.eq.s32.totalorder %s22, 1
      %p212 = por %p210, %p211
      %p213 = scmp.ne.s32.totalorder %s205, %s208
      %p214 = scmp.eq.s32.totalorder %s22, 0
      %p215 = por %p213, %p214
      %p216 = scmp.ne.s32.totalorder %s205, %s208
      %p217 = scmp.eq.s32.totalorder %s27, 1
      %p218 = por %p216, %p217
      %p219 = scmp.ne.s32.totalorder %s208, %s209
      %p220 = scmp.eq.s32.totalorder %s27, 0
      %p221 = por %p219, %p220
      %p222 = scmp.ne.s32.totalorder %s208, %s209
      %p223 = scmp.eq.s32.totalorder %s28, 1
      %p224 = por %p222, %p223
      %p226 = scmp.ne.s32.totalorder %s209, %s225
      %p227 = scmp.eq.s32.totalorder %s28, 0
      %p228 = por %p226, %p227
      %p229 = scmp.le.s32.totalorder 1, %s22
      %p230 = scmp.lt.s32.totalorder %s22, 3
      %p231 = pnand %p229, %p230
      %p232 = pneg %p231
      // Predicated region
      $region9: #{tpu_custom_call.1} parent=5 // pred_check
        _
      $region10: #{tpu_custom_call.1} parent=5 // pred_check_branch
        %234 = sbr.rel (%p231) target = $region12
      $region11: #{tpu_custom_call.1} parent=5 // pred_region
        %s235 = ssub.s32 %s22, 1
        // Predicated region
        $region13: #{tpu_custom_call.1} parent=11 // pred_check
          %p236 = pneg %p69
        $region14: #{tpu_custom_call.1} parent=11 // pred_check_branch
          %238 = sbr.rel (%p236) target = $region16
        $region15: #{tpu_custom_call.1} parent=11 // pred_region
          _
        $region16: #{tpu_custom_call.1} parent=11 // pred_fallthru
          _
        // Predicated region
        $region17: #{tpu_custom_call.1} parent=11 // pred_check
          %p239 = pneg %p90
        $region18: #{tpu_custom_call.1} parent=11 // pred_check_branch
          %241 = sbr.rel (%p239) target = $region20
        $region19: #{tpu_custom_call.1} parent=11 // pred_region
          _
        $region20: #{tpu_custom_call.1} parent=11 // pred_fallthru
          _
        // Predicated region
        $region21: #{tpu_custom_call.1} parent=11 // pred_check
          %p242 = pneg %p111
        $region22: #{tpu_custom_call.1} parent=11 // pred_check_branch
          %244 = sbr.rel (%p242) target = $region24
        $region23: #{tpu_custom_call.1} parent=11 // pred_region
          _
        $region24: #{tpu_custom_call.1} parent=11 // pred_fallthru
          _
        // Predicated region
        $region25: #{tpu_custom_call.1} parent=11 // pred_check
          %p245 = pneg %p132
        $region26: #{tpu_custom_call.1} parent=11 // pred_check_branch
          %247 = sbr.rel (%p245) target = $region28
        $region27: #{tpu_custom_call.1} parent=11 // pred_region
          _
        $region28: #{tpu_custom_call.1} parent=11 // pred_fallthru
          _
        // Predicated region
        $region29: #{tpu_custom_call.1} parent=11 // pred_check
          %p248 = pneg %p153
        $region30: #{tpu_custom_call.1} parent=11 // pred_check_branch
          %250 = sbr.rel (%p248) target = $region32
        $region31: #{tpu_custom_call.1} parent=11 // pred_region
          _
        $region32: #{tpu_custom_call.1} parent=11 // pred_fallthru
          _
        // Predicated region
        $region33: #{tpu_custom_call.1} parent=11 // pred_check
          %p251 = pneg %p174
        $region34: #{tpu_custom_call.1} parent=11 // pred_check_branch
          %253 = sbr.rel (%p251) target = $region36
        $region35: #{tpu_custom_call.1} parent=11 // pred_region
          %255 = vsyncadd [#allocation5], 0
          %s257 = sshll.u32 %s6, 4
          %s258 = int_to_ptr.vmem [resolvable:$true] %s257
          %260 = dma.vmem_to_smem %s258, 16, [#allocation6], [#allocation5]
        $region36: #{tpu_custom_call.1} parent=11 // pred_fallthru
          _
        // Predicated region
        $region37: #{tpu_custom_call.1} parent=11 // pred_check
          %p261 = pneg %p195
        $region38: #{tpu_custom_call.1} parent=11 // pred_check_branch
          %263 = sbr.rel (%p261) target = $region40
        $region39: #{tpu_custom_call.1} parent=11 // pred_region
          %265 = vsyncadd [#allocation8], 0
          %s267 = sshll.u32 %s7, 4
          %s268 = int_to_ptr.vmem [resolvable:$true] %s267
          %270 = dma.vmem_to_smem %s268, 16, [#allocation7], [#allocation8]
        $region40: #{tpu_custom_call.1} parent=11 // pred_fallthru
          _
      $region12: #{tpu_custom_call.1} parent=5 // pred_fallthru
        _
      %p271 = scmp.lt.s32.totalorder %s22, 2
      // Predicated region
      $region41: #{tpu_custom_call.1} parent=5 // pred_check
        %p272 = pneg %p271
      $region42: #{tpu_custom_call.1} parent=5 // pred_check_branch
        %274 = sbr.rel (%p272) target = $region44
      $region43: #{tpu_custom_call.1} parent=5 // pred_region
        // Predicated region
        $region45: #{tpu_custom_call.1} parent=43 // pred_check
          %p275 = pneg %p42
        $region46: #{tpu_custom_call.1} parent=43 // pred_check_branch
          %277 = sbr.rel (%p275) target = $region48
        $region47: #{tpu_custom_call.1} parent=43 // pred_region
          %s278 = sand.u32 %s32, 1
          %s279 = scalar_lea.sflag [#allocation3], %s278
          %s280 = sand.u32 %s32, 1
          %s281 = smul.addr %s280, 128
          %s282 = scalar_lea.vmem [#allocation2], %s281
          %s283 = smul.u32 2, %s22
          %285 = vsyncadd %s279, 0
          %s286 = smul.addr %s283, 8
          %s287 = smul.addr %s286, 8
          %s288 = scalar_lea.hbm %s0, %s287
          %s289 = sshll.u32 %s288, 4
          %s290 = int_to_ptr.hbm [resolvable:$true] %s289
          %s291 = sshll.u32 %s282, 4
          %s292 = int_to_ptr.vmem [resolvable:$true] %s291
          %297 = dma.hbm_to_vmem [thread:$0]  %s290, 2048, %s292, %s279, 256, 256, 16
        $region48: #{tpu_custom_call.1} parent=43 // pred_fallthru
          _
      $region44: #{tpu_custom_call.1} parent=5 // pred_fallthru
        _
      %p298 = scmp.le.s32.totalorder 1, %s22
      %p299 = scmp.lt.s32.totalorder %s22, 3
      %p300 = pnand %p298, %p299
      %p301 = pneg %p300
      // Predicated region
      $region49: #{tpu_custom_call.1} parent=5 // pred_check
        _
      $region50: #{tpu_custom_call.1} parent=5 // pred_check_branch
        %303 = sbr.rel (%p300) target = $region52
      $region51: #{tpu_custom_call.1} parent=5 // pred_region
        %s304 = ssub.s32 %s22, 1
        %s305 = sand.u32 %s35, 1
        %s306 = scalar_lea.sflag [#allocation3], %s305
        %s307 = sand.u32 %s35, 1
        %s308 = smul.addr %s307, 128
        %s309 = scalar_lea.vmem [#allocation2], %s308
        // Predicated region
        $region53: #{tpu_custom_call.1} parent=51 // pred_check
          %p310 = pneg %p48
        $region54: #{tpu_custom_call.1} parent=51 // pred_check_branch
          %312 = sbr.rel (%p310) target = $region56
        $region55: #{tpu_custom_call.1} parent=51 // pred_region
          %314 = dma.done %s306, 2048
        $region56: #{tpu_custom_call.1} parent=51 // pred_fallthru
          _
        // Predicated region
        $region57: #{tpu_custom_call.1} parent=51 // pred_check
          %p315 = pneg %p174
        $region58: #{tpu_custom_call.1} parent=51 // pred_check_branch
          %317 = sbr.rel (%p315) target = $region60
        $region59: #{tpu_custom_call.1} parent=51 // pred_region
          %319 = dma.done [#allocation5], 16
        $region60: #{tpu_custom_call.1} parent=51 // pred_fallthru
          _
        // Predicated region
        $region61: #{tpu_custom_call.1} parent=51 // pred_check
          %p320 = pneg %p195
        $region62: #{tpu_custom_call.1} parent=51 // pred_check_branch
          %322 = sbr.rel (%p320) target = $region64
        $region63: #{tpu_custom_call.1} parent=51 // pred_region
          %324 = dma.done [#allocation8], 16
        $region64: #{tpu_custom_call.1} parent=51 // pred_fallthru
          _
        %325 = sfence
        %s326 = sand.u32 %s35, 1
        %s327 = scalar_lea.sflag [#allocation3], %s326
        %s328 = sand.u32 %s35, 1
        %s329 = smul.addr %s328, 128
        %s330 = scalar_lea.vmem [#allocation2], %s329
        %p331 = pneg %p48
        %p332 = pneg %p45
        %p333 = pneg %p69
        %p334 = pneg %p66
        %p335 = pneg %p90
        %p336 = pneg %p87
        %p337 = pneg %p111
        %p338 = pneg %p108
        %p339 = pneg %p132
        %p340 = pneg %p129
        %p341 = pneg %p153
        %p342 = pneg %p150
        %p343 = pneg %p174
        %p344 = pneg %p171
        %p345 = pneg %p195
        %p346 = pneg %p192
        %p347 = pneg %p221
        %p348 = pneg %p218
        %s349 = sand.u32 %s208, 1
        %s350 = scalar_lea.sflag [#allocation4], %s349
        %s351 = sand.u32 %s208, 1
        %s352 = smul.addr %s351, 128
        %s353 = scalar_lea.vmem [#allocation9], %s352
        %s354 = smul.u32 2, %s27
        %s355 = smul.u32 2, %s27
        %v356 = vld [vmem:[%s309] sm:$0xff]
        %v357 = vld [vmem:[%s309 + $0x8] sm:$0xff]
        %v358 = vld [vmem:[%s309 + $0x10] sm:$0xff]
        %v359 = vld [vmem:[%s309 + $0x18] sm:$0xff]
        %v360 = vld [vmem:[%s309 + $0x20] sm:$0xff]
        %v361 = vld [vmem:[%s309 + $0x28] sm:$0xff]
        %v362 = vld [vmem:[%s309 + $0x30] sm:$0xff]
        %v363 = vld [vmem:[%s309 + $0x38] sm:$0xff]
        %v364 = vld [vmem:[%s309 + $0x40] sm:$0xff]
        %v365 = vld [vmem:[%s309 + $0x48] sm:$0xff]
        %v366 = vld [vmem:[%s309 + $0x50] sm:$0xff]
        %v367 = vld [vmem:[%s309 + $0x58] sm:$0xff]
        %v368 = vld [vmem:[%s309 + $0x60] sm:$0xff]
        %v369 = vld [vmem:[%s309 + $0x68] sm:$0xff]
        %v370 = vld [vmem:[%s309 + $0x70] sm:$0xff]
        %v371 = vld [vmem:[%s309 + $0x78] sm:$0xff]
        %v372 = vadd.f32 %v356, %v357
        %373 = vadd.xlane.f32.xlu0 %v372
        %v374 = vpop.xlane.xlu0 %373
        %v375 = vadd.f32 %v358, %v359
        %376 = vadd.xlane.f32.xlu0 %v375
        %v377 = vpop.xlane.xlu0 %376
        %v378 = vadd.f32 %v360, %v361
        %379 = vadd.xlane.f32.xlu0 %v378
        %v380 = vpop.xlane.xlu0 %379
        %v381 = vadd.f32 %v362, %v363
        %382 = vadd.xlane.f32.xlu0 %v381
        %v383 = vpop.xlane.xlu0 %382
        %v384 = vadd.f32 %v364, %v365
        %385 = vadd.xlane.f32.xlu0 %v384
        %v386 = vpop.xlane.xlu0 %385
        %v387 = vadd.f32 %v366, %v367
        %388 = vadd.xlane.f32.xlu0 %v387
        %v389 = vpop.xlane.xlu0 %388
        %v390 = vadd.f32 %v368, %v369
        %391 = vadd.xlane.f32.xlu0 %v390
        %v392 = vpop.xlane.xlu0 %391
        %v393 = vadd.f32 %v370, %v371
        %394 = vadd.xlane.f32.xlu0 %v393
        %v395 = vpop.xlane.xlu0 %394
        %v396 = vrcp.pop 256.0
        %v397 = vmul.f32 256.0, %v396
        %v398 = vsub.f32 1.0, %v397
        %v399 = vmul.f32 %v396, %v398
        %v400 = vadd.f32 %v396, %v399
        %vm401 = vweird.f32 %v396
        %v402 = vsel %vm401, %v396, %v400
        %v403 = vmul.f32 %v374, %v402
        %v404 = vmul.f32 %v377, %v402
        %v405 = vmul.f32 %v380, %v402
        %v406 = vmul.f32 %v383, %v402
        %v407 = vmul.f32 %v386, %v402
        %v408 = vmul.f32 %v389, %v402
        %v409 = vmul.f32 %v392, %v402
        %v410 = vmul.f32 %v395, %v402
        %v411 = vmax.f32 %v356, %v357
        %412 = vmax.xlane.f32.xlu0 %v411
        %v413 = vpop.xlane.xlu0 %412
        %v414 = vmax.f32 %v358, %v359
        %415 = vmax.xlane.f32.xlu0 %v414
        %v416 = vpop.xlane.xlu0 %415
        %v417 = vmax.f32 %v360, %v361
        %418 = vmax.xlane.f32.xlu0 %v417
        %v419 = vpop.xlane.xlu0 %418
        %v420 = vmax.f32 %v362, %v363
        %421 = vmax.xlane.f32.xlu0 %v420
        %v422 = vpop.xlane.xlu0 %421
        %v423 = vmax.f32 %v364, %v365
        %424 = vmax.xlane.f32.xlu0 %v423
        %v425 = vpop.xlane.xlu0 %424
        %v426 = vmax.f32 %v366, %v367
        %427 = vmax.xlane.f32.xlu0 %v426
        %v428 = vpop.xlane.xlu0 %427
        %v429 = vmax.f32 %v368, %v369
        %430 = vmax.xlane.f32.xlu0 %v429
        %v431 = vpop.xlane.xlu0 %430
        %v432 = vmax.f32 %v370, %v371
        %433 = vmax.xlane.f32.xlu0 %v432
        %v434 = vpop.xlane.xlu0 %433
        %v443 = vlaneseq
        %v444 = vand.u32 %v443, 127
        %v445 = vperm.slane %v403, %v444
        %v446 = vadd.s32 %v444, 4294967288
        %v447 = vperm.slane %v404, %v446
        %vm448 = vcmask 130112
        %v449 = vsel %vm448, %v447, %v445
        %v450 = vadd.s32 %v444, 4294967280
        %v451 = vperm.slane %v405, %v450
        %vm452 = vcmask 195712
        %v453 = vsel %vm452, %v451, %v449
        %v454 = vadd.s32 %v444, 4294967272
        %v455 = vperm.slane %v406, %v454
        %vm456 = vcmask 261312
        %v457 = vsel %vm456, %v455, %v453
        %v458 = vperm.slane %v407, %v444
        %v459 = vperm.slane %v408, %v446
        %v460 = vsel %vm448, %v459, %v458
        %v461 = vperm.slane %v409, %v450
        %v462 = vsel %vm452, %v461, %v460
        %v463 = vperm.slane %v410, %v454
        %v464 = vsel %vm456, %v463, %v462
        %vm465 = vcmask 1041409
        %v466 = vsel %vm465, %v464, %v457
        %v476 = vperm.slane %v413, %v444
        %v477 = vperm.slane %v416, %v446
        %v478 = vsel %vm448, %v477, %v476
        %v479 = vperm.slane %v419, %v450
        %v480 = vsel %vm452, %v479, %v478
        %v481 = vperm.slane %v422, %v454
        %v482 = vsel %vm456, %v481, %v480
        %v483 = vperm.slane %v425, %v444
        %v484 = vperm.slane %v428, %v446
        %v485 = vsel %vm448, %v484, %v483
        %v486 = vperm.slane %v431, %v450
        %v487 = vsel %vm452, %v486, %v485
        %v488 = vperm.slane %v434, %v454
        %v489 = vsel %vm456, %v488, %v487
        %vm490 = vcmask 1043459
        %v491 = vsel %vm490, %v489, %v482
        %vm493 = vcmask 1041408
        %v494 = vsel %vm493, %v466, %v491
        %v495 = vld [vmem:[%s1] sm:$0xff]
        %v496 = vld [vmem:[%s1 + $0x8] sm:$0xff]
        %v497 = vld [vmem:[%s1 + $0x10] sm:$0xff]
        %v498 = vld [vmem:[%s1 + $0x18] sm:$0xff]
        %v499 = vld [vmem:[%s2] sm:$0x1]
        %v501 = vperm.slane %v499, 0
        %vm503 = vcmask 261120
        %v505 = vsel %vm503, %v494, 0
        %507 = vmatpush.msra.mxu0 0.0
        %508 = vmatpush.msra.mxu0 0.0
        %509 = vmatpush.msra.mxu0 0.0
        %510 = vmatpush.msra.mxu0 0.0
        %511 = vmatpush.msra.mxu0 0.0
        %512 = vmatpush.msra.mxu0 0.0
        %513 = vmatpush.msra.mxu0 0.0
        %514 = vmatpush.msra.mxu0 0.0
        %515 = vmatpush.msra.mxu0 0.0
        %516 = vmatpush.msra.mxu0 0.0
        %517 = vmatpush.msra.mxu0 0.0
        %518 = vmatpush.msra.mxu0 0.0
        %519 = vmatpush.msra.mxu0 %v498
        %520 = vmatpush.msra.mxu0 %v497
        %521 = vmatpush.msra.mxu0 %v496
        %522 = vmatpush.msra.mxu0 %v495
        %523 = vmatmul.f32.gmra.mxu0 %v505
        %v524 = vpop.f32.mrf.mxu0
        %v525 = vadd.f32 %v501, %v524
        %526 = vdwg.mxu0
        %v527 = vmax.f32 %v525, 0.0
        %v528 = vld [vmem:[%s3] sm:$0x3]
        %v529 = vld [vmem:[%s4] sm:$0x1]
        %v531 = vperm.slane %v529, 0
        %vm533 = vcmask 15360
        %v535 = vsel %vm533, %v527, 0
        %v538 = vsel %vm493, %v528, 0
        %540 = vmatpush.msra.mxu0 0.0
        %541 = vmatpush.msra.mxu0 0.0
        %542 = vmatpush.msra.mxu0 0.0
        %543 = vmatpush.msra.mxu0 0.0
        %544 = vmatpush.msra.mxu0 0.0
        %545 = vmatpush.msra.mxu0 0.0
        %546 = vmatpush.msra.mxu0 0.0
        %547 = vmatpush.msra.mxu0 0.0
        %548 = vmatpush.msra.mxu0 0.0
        %549 = vmatpush.msra.mxu0 0.0
        %550 = vmatpush.msra.mxu0 0.0
        %551 = vmatpush.msra.mxu0 0.0
        %552 = vmatpush.msra.mxu0 0.0
        %553 = vmatpush.msra.mxu0 0.0
        %554 = vmatpush.msra.mxu0 0.0
        %555 = vmatpush.msra.mxu0 %v538
        %556 = vmatmul.f32.gmra.mxu0 %v535
        %v557 = vpop.f32.mrf.mxu0
        %v558 = vadd.f32 %v531, %v557
        %559 = vdwg.mxu0
        %v561 = vrot.slane %v558, 2
        %v563 = vadd.f32 %v558, %v561
        %v564 = vxor.u32 %v563, 2147483648
        %v565 = vmul.f32 %v564, 1.442695
        %v566 = vpow.pop %v565
        %v567 = vadd.f32 %v566, 1.0
        %v568 = vrcp.pop %v567
        %v569 = vmul.f32 %v567, %v568
        %v570 = vsub.f32 1.0, %v569
        %v571 = vmul.f32 %v568, %v570
        %v572 = vadd.f32 %v568, %v571
        %vm573 = vweird.f32 %v567
        %vm574 = vweird.f32 %v568
        %vm575 = vmor %vm573, %vm574
        %v576 = vsel %vm575, %v568, %v572
        %v577 = vand.u32 2147483647, %v567
        %vm578 = vcmp.eq.f32.partialorder %v577, 8.507059e+37
        %v579 = vand.u32 %v567, 2147483648
        %v580 = vor.u32 1.1754944e-38, %v579
        %v581 = vsel %vm578, %v580, %v576
        %v582 = vmul.f32 1.0, %v581
        %v583 = vperm.slane %v582, 0
        %v584 = vlaneseq
        %v585 = vshrl.u32 %v584, 7
        %587 = vset.pattern.permute.xlu0 %v585
        %588 = vperm.xlu0 %587, %v583
        %v589 = vpop.permute.xlu0 %588
        %v590 = vlaneseq
        %v591 = vshrl.u32 %v590, 7
        %v592 = vadd.s32 %v591, 8
        %593 = vset.pattern.permute.xlu0 %v592
        %594 = vperm.xlu0 %593, %v583
        %v595 = vpop.permute.xlu0 %594
        %v596 = vlaneseq
        %v597 = vshrl.u32 %v596, 7
        %v598 = vadd.s32 %v597, 16
        %599 = vset.pattern.permute.xlu0 %v598
        %600 = vperm.xlu0 %599, %v583
        %v601 = vpop.permute.xlu0 %600
        %v602 = vlaneseq
        %v603 = vshrl.u32 %v602, 7
        %v604 = vadd.s32 %v603, 24
        %605 = vset.pattern.permute.xlu0 %v604
        %606 = vperm.xlu0 %605, %v583
        %v607 = vpop.permute.xlu0 %606
        %v608 = vperm.slane %v582, 1
        %v609 = vlaneseq
        %v610 = vshrl.u32 %v609, 7
        %612 = vset.pattern.permute.xlu0 %v610
        %613 = vperm.xlu0 %612, %v608
        %v614 = vpop.permute.xlu0 %613
        %v615 = vlaneseq
        %v616 = vshrl.u32 %v615, 7
        %v617 = vadd.s32 %v616, 8
        %618 = vset.pattern.permute.xlu0 %v617
        %619 = vperm.xlu0 %618, %v608
        %v620 = vpop.permute.xlu0 %619
        %v621 = vlaneseq
        %v622 = vshrl.u32 %v621, 7
        %v623 = vadd.s32 %v622, 16
        %624 = vset.pattern.permute.xlu0 %v623
        %625 = vperm.xlu0 %624, %v608
        %v626 = vpop.permute.xlu0 %625
        %v627 = vlaneseq
        %v628 = vshrl.u32 %v627, 7
        %v629 = vadd.s32 %v628, 24
        %630 = vset.pattern.permute.xlu0 %v629
        %631 = vperm.xlu0 %630, %v608
        %v632 = vpop.permute.xlu0 %631
        %v633 = vmul.f32 %v356, %v589
        %v634 = vmul.f32 %v357, %v589
        %v635 = vmul.f32 %v358, %v595
        %v636 = vmul.f32 %v359, %v595
        %v637 = vmul.f32 %v360, %v601
        %v638 = vmul.f32 %v361, %v601
        %v639 = vmul.f32 %v362, %v607
        %v640 = vmul.f32 %v363, %v607
        %v641 = vmul.f32 %v364, %v614
        %v642 = vmul.f32 %v365, %v614
        %v643 = vmul.f32 %v366, %v620
        %v644 = vmul.f32 %v367, %v620
        %v645 = vmul.f32 %v368, %v626
        %v646 = vmul.f32 %v369, %v626
        %v647 = vmul.f32 %v370, %v632
        %v648 = vmul.f32 %v371, %v632
        %v649 = vmax.f32 %v633, %v635
        %v650 = vmax.f32 %v649, %v637
        %v651 = vmax.f32 %v650, %v639
        %v652 = vrot.slane %v651, 4
        %v653 = vmax.f32 %v651, %v652
        %v654 = vrot.slane %v653, 2
        %v655 = vmax.f32 %v653, %v654
        %v656 = vrot.slane %v655, 1
        %v657 = vmax.f32 %v655, %v656
        %v658 = vmax.f32 %v634, %v636
        %v659 = vmax.f32 %v658, %v638
        %v660 = vmax.f32 %v659, %v640
        %v661 = vrot.slane %v660, 4
        %v662 = vmax.f32 %v660, %v661
        %v663 = vrot.slane %v662, 2
        %v664 = vmax.f32 %v662, %v663
        %v665 = vrot.slane %v664, 1
        %v666 = vmax.f32 %v664, %v665
        %v667 = vmax.f32 %v641, %v643
        %v668 = vmax.f32 %v667, %v645
        %v669 = vmax.f32 %v668, %v647
        %v670 = vrot.slane %v669, 4
        %v671 = vmax.f32 %v669, %v670
        %v672 = vrot.slane %v671, 2
        %v673 = vmax.f32 %v671, %v672
        %v674 = vrot.slane %v673, 1
        %v675 = vmax.f32 %v673, %v674
        %v676 = vmax.f32 %v642, %v644
        %v677 = vmax.f32 %v676, %v646
        %v678 = vmax.f32 %v677, %v648
        %v679 = vrot.slane %v678, 4
        %v680 = vmax.f32 %v678, %v679
        %v681 = vrot.slane %v680, 2
        %v682 = vmax.f32 %v680, %v681
        %v683 = vrot.slane %v682, 1
        %v684 = vmax.f32 %v682, %v683
        %v685 = vadd.f32 %v633, %v635
        %v686 = vadd.f32 %v685, %v637
        %v687 = vadd.f32 %v686, %v639
        %v688 = vrot.slane %v687, 4
        %v689 = vadd.f32 %v687, %v688
        %v690 = vrot.slane %v689, 2
        %v691 = vadd.f32 %v689, %v690
        %v692 = vrot.slane %v691, 1
        %v693 = vadd.f32 %v691, %v692
        %v694 = vadd.f32 %v634, %v636
        %v695 = vadd.f32 %v694, %v638
        %v696 = vadd.f32 %v695, %v640
        %v697 = vrot.slane %v696, 4
        %v698 = vadd.f32 %v696, %v697
        %v699 = vrot.slane %v698, 2
        %v700 = vadd.f32 %v698, %v699
        %v701 = vrot.slane %v700, 1
        %v702 = vadd.f32 %v700, %v701
        %v703 = vadd.f32 %v641, %v643
        %v704 = vadd.f32 %v703, %v645
        %v705 = vadd.f32 %v704, %v647
        %v706 = vrot.slane %v705, 4
        %v707 = vadd.f32 %v705, %v706
        %v708 = vrot.slane %v707, 2
        %v709 = vadd.f32 %v707, %v708
        %v710 = vrot.slane %v709, 1
        %v711 = vadd.f32 %v709, %v710
        %v712 = vadd.f32 %v642, %v644
        %v713 = vadd.f32 %v712, %v646
        %v714 = vadd.f32 %v713, %v648
        %v715 = vrot.slane %v714, 4
        %v716 = vadd.f32 %v714, %v715
        %v717 = vrot.slane %v716, 2
        %v718 = vadd.f32 %v716, %v717
        %v719 = vrot.slane %v718, 1
        %v720 = vadd.f32 %v718, %v719
        %v721 = vrcp.pop 32.0
        %v722 = vmul.f32 32.0, %v721
        %v723 = vsub.f32 1.0, %v722
        %v724 = vmul.f32 %v721, %v723
        %v725 = vadd.f32 %v721, %v724
        %vm726 = vweird.f32 %v721
        %v727 = vsel %vm726, %v721, %v725
        %v728 = vmul.f32 %v693, %v727
        %v729 = vmul.f32 %v702, %v727
        %v730 = vmul.f32 %v711, %v727
        %v731 = vmul.f32 %v720, %v727
        %v732 = vld [vmem:[%s5] sm:$0xff]
        %v733 = vld [vmem:[%s5 + $0x8] sm:$0xff]
        %v734 = vld [vmem:[%s5 + $0x10] sm:$0xf]
        %v735 = vld [vmem:[%s5 + $0x18] sm:$0xf]
        %v740 = vsel %vm465, %v675, %v657
        %v741 = vsel %vm465, %v684, %v666
        %744 = vrot.lane.b32.xlu0 %v740, 3
        %v745 = vpop.permute.xlu0 %744
        %746 = vrot.lane.b32.xlu0 %v741, 3
        %v747 = vpop.permute.xlu0 %746
        %vm748 = vcmp.lt.s32.totalorder %v444, 3
        %v749 = vsel %vm748, %v745, %v747
        %v750 = vsel %vm748, %v747, %v745
        %v751 = vperm.slane %v732, 0
        %v752 = vperm.slane %v733, 0
        %v753 = vmul.f32 %v750, %v751
        %v754 = vmul.f32 %v749, %v752
        %v759 = vsel %vm465, %v730, %v728
        %v760 = vsel %vm465, %v731, %v729
        %763 = vrot.lane.b32.xlu0 %v759, 3
        %v764 = vpop.permute.xlu0 %763
        %765 = vrot.lane.b32.xlu0 %v760, 3
        %v766 = vpop.permute.xlu0 %765
        %v767 = vsel %vm748, %v764, %v766
        %v768 = vsel %vm748, %v766, %v764
        %v769 = vmul.f32 %v768, %v751
        %v770 = vmul.f32 %v767, %v752
        %s771 = sld [smem:[#allocation6]]
        %v772 = vstv %s771
        %v773 = vmul.f32 %v772, %v753
        %v774 = vmul.f32 %v772, %v754
        %s775 = sld [smem:[#allocation6 + $0x31]]
        %v776 = vstv %s775
        %v777 = vmul.f32 %v776, %v769
        %v778 = vmul.f32 %v776, %v770
        %v779 = vadd.f32 %v773, %v777
        %v780 = vadd.f32 %v774, %v778
        %s781 = sld [smem:[#allocation6 + $0x7]]
        %v782 = vstv %s781
        %v783 = vmul.f32 %v782, %v753
        %v784 = vmul.f32 %v782, %v754
        %s785 = sld [smem:[#allocation6 + $0x38]]
        %v786 = vstv %s785
        %v787 = vmul.f32 %v786, %v769
        %v788 = vmul.f32 %v786, %v770
        %v789 = vadd.f32 %v783, %v787
        %v790 = vadd.f32 %v784, %v788
        %s791 = sld [smem:[#allocation6 + $0xe]]
        %v792 = vstv %s791
        %v793 = vmul.f32 %v792, %v753
        %v794 = vmul.f32 %v792, %v754
        %s795 = sld [smem:[#allocation6 + $0x3f]]
        %v796 = vstv %s795
        %v797 = vmul.f32 %v796, %v769
        %v798 = vmul.f32 %v796, %v770
        %v799 = vadd.f32 %v793, %v797
        %v800 = vadd.f32 %v794, %v798
        %s801 = sld [smem:[#allocation6 + $0x15]]
        %v802 = vstv %s801
        %v803 = vmul.f32 %v802, %v753
        %v804 = vmul.f32 %v802, %v754
        %s805 = sld [smem:[#allocation6 + $0x46]]
        %v806 = vstv %s805
        %v807 = vmul.f32 %v806, %v769
        %v808 = vmul.f32 %v806, %v770
        %v809 = vadd.f32 %v803, %v807
        %v810 = vadd.f32 %v804, %v808
        %s811 = sld [smem:[#allocation6 + $0x1c]]
        %v812 = vstv %s811
        %v813 = vmul.f32 %v812, %v753
        %v814 = vmul.f32 %v812, %v754
        %s815 = sld [smem:[#allocation6 + $0x4d]]
        %v816 = vstv %s815
        %v817 = vmul.f32 %v816, %v769
        %v818 = vmul.f32 %v816, %v770
        %v819 = vadd.f32 %v813, %v817
        %v820 = vadd.f32 %v814, %v818
        %s821 = sld [smem:[#allocation6 + $0x23]]
        %v822 = vstv %s821
        %v823 = vmul.f32 %v822, %v753
        %v824 = vmul.f32 %v822, %v754
        %s825 = sld [smem:[#allocation6 + $0x54]]
        %v826 = vstv %s825
        %v827 = vmul.f32 %v826, %v769
        %v828 = vmul.f32 %v826, %v770
        %v829 = vadd.f32 %v823, %v827
        %v830 = vadd.f32 %v824, %v828
        %s831 = sld [smem:[#allocation6 + $0x2a]]
        %v832 = vstv %s831
        %v833 = vmul.f32 %v832, %v753
        %v834 = vmul.f32 %v832, %v754
        %s835 = sld [smem:[#allocation6 + $0x5b]]
        %v836 = vstv %s835
        %v837 = vmul.f32 %v836, %v769
        %v838 = vmul.f32 %v836, %v770
        %v839 = vadd.f32 %v833, %v837
        %v840 = vadd.f32 %v834, %v838
        %841 = vrot.lane.b32.xlu0 %v740, 2
        %v842 = vpop.permute.xlu0 %841
        %843 = vrot.lane.b32.xlu0 %v741, 2
        %v844 = vpop.permute.xlu0 %843
        %vm845 = vcmp.lt.s32.totalorder %v444, 2
        %v846 = vsel %vm845, %v842, %v844
        %v847 = vsel %vm845, %v844, %v842
        %v848 = vperm.slane %v732, 1
        %v849 = vperm.slane %v733, 1
        %v850 = vmul.f32 %v847, %v848
        %v851 = vmul.f32 %v846, %v849
        %852 = vrot.lane.b32.xlu0 %v759, 2
        %v853 = vpop.permute.xlu0 %852
        %854 = vrot.lane.b32.xlu0 %v760, 2
        %v855 = vpop.permute.xlu0 %854
        %v856 = vsel %vm845, %v853, %v855
        %v857 = vsel %vm845, %v855, %v853
        %v858 = vmul.f32 %v857, %v848
        %v859 = vmul.f32 %v856, %v849
        %s860 = sld [smem:[#allocation6 + $0x1]]
        %v861 = vstv %s860
        %v862 = vmul.f32 %v861, %v850
        %v863 = vmul.f32 %v861, %v851
        %s864 = sld [smem:[#allocation6 + $0x32]]
        %v865 = vstv %s864
        %v866 = vmul.f32 %v865, %v858
        %v867 = vmul.f32 %v865, %v859
        %v868 = vadd.f32 %v862, %v866
        %v869 = vadd.f32 %v863, %v867
        %v870 = vadd.f32 %v779, %v868
        %v871 = vadd.f32 %v780, %v869
        %s872 = sld [smem:[#allocation6 + $0x8]]
        %v873 = vstv %s872
        %v874 = vmul.f32 %v873, %v850
        %v875 = vmul.f32 %v873, %v851
        %s876 = sld [smem:[#allocation6 + $0x39]]
        %v877 = vstv %s876
        %v878 = vmul.f32 %v877, %v858
        %v879 = vmul.f32 %v877, %v859
        %v880 = vadd.f32 %v874, %v878
        %v881 = vadd.f32 %v875, %v879
        %v882 = vadd.f32 %v789, %v880
        %v883 = vadd.f32 %v790, %v881
        %s884 = sld [smem:[#allocation6 + $0xf]]
        %v885 = vstv %s884
        %v886 = vmul.f32 %v885, %v850
        %v887 = vmul.f32 %v885, %v851
        %s888 = sld [smem:[#allocation6 + $0x40]]
        %v889 = vstv %s888
        %v890 = vmul.f32 %v889, %v858
        %v891 = vmul.f32 %v889, %v859
        %v892 = vadd.f32 %v886, %v890
        %v893 = vadd.f32 %v887, %v891
        %v894 = vadd.f32 %v799, %v892
        %v895 = vadd.f32 %v800, %v893
        %s896 = sld [smem:[#allocation6 + $0x16]]
        %v897 = vstv %s896
        %v898 = vmul.f32 %v897, %v850
        %v899 = vmul.f32 %v897, %v851
        %s900 = sld [smem:[#allocation6 + $0x47]]
        %v901 = vstv %s900
        %v902 = vmul.f32 %v901, %v858
        %v903 = vmul.f32 %v901, %v859
        %v904 = vadd.f32 %v898, %v902
        %v905 = vadd.f32 %v899, %v903
        %v906 = vadd.f32 %v809, %v904
        %v907 = vadd.f32 %v810, %v905
        %s908 = sld [smem:[#allocation6 + $0x1d]]
        %v909 = vstv %s908
        %v910 = vmul.f32 %v909, %v850
        %v911 = vmul.f32 %v909, %v851
        %s912 = sld [smem:[#allocation6 + $0x4e]]
        %v913 = vstv %s912
        %v914 = vmul.f32 %v913, %v858
        %v915 = vmul.f32 %v913, %v859
        %v916 = vadd.f32 %v910, %v914
        %v917 = vadd.f32 %v911, %v915
        %v918 = vadd.f32 %v819, %v916
        %v919 = vadd.f32 %v820, %v917
        %s920 = sld [smem:[#allocation6 + $0x24]]
        %v921 = vstv %s920
        %v922 = vmul.f32 %v921, %v850
        %v923 = vmul.f32 %v921, %v851
        %s924 = sld [smem:[#allocation6 + $0x55]]
        %v925 = vstv %s924
        %v926 = vmul.f32 %v925, %v858
        %v927 = vmul.f32 %v925, %v859
        %v928 = vadd.f32 %v922, %v926
        %v929 = vadd.f32 %v923, %v927
        %v930 = vadd.f32 %v829, %v928
        %v931 = vadd.f32 %v830, %v929
        %s932 = sld [smem:[#allocation6 + $0x2b]]
        %v933 = vstv %s932
        %v934 = vmul.f32 %v933, %v850
        %v935 = vmul.f32 %v933, %v851
        %s936 = sld [smem:[#allocation6 + $0x5c]]
        %v937 = vstv %s936
        %v938 = vmul.f32 %v937, %v858
        %v939 = vmul.f32 %v937, %v859
        %v940 = vadd.f32 %v934, %v938
        %v941 = vadd.f32 %v935, %v939
        %v942 = vadd.f32 %v839, %v940
        %v943 = vadd.f32 %v840, %v941
        %944 = vrot.lane.b32.xlu0 %v740, 1
        %v945 = vpop.permute.xlu0 %944
        %946 = vrot.lane.b32.xlu0 %v741, 1
        %v947 = vpop.permute.xlu0 %946
        %vm948 = vcmp.lt.s32.totalorder %v444, 1
        %v949 = vsel %vm948, %v945, %v947
        %v950 = vsel %vm948, %v947, %v945
        %v951 = vperm.slane %v732, 2
        %v952 = vperm.slane %v733, 2
        %v953 = vmul.f32 %v950, %v951
        %v954 = vmul.f32 %v949, %v952
        %955 = vrot.lane.b32.xlu0 %v759, 1
        %v956 = vpop.permute.xlu0 %955
        %957 = vrot.lane.b32.xlu0 %v760, 1
        %v958 = vpop.permute.xlu0 %957
        %v959 = vsel %vm948, %v956, %v958
        %v960 = vsel %vm948, %v958, %v956
        %v961 = vmul.f32 %v960, %v951
        %v962 = vmul.f32 %v959, %v952
        %s963 = sld [smem:[#allocation6 + $0x2]]
        %v964 = vstv %s963
        %v965 = vmul.f32 %v964, %v953
        %v966 = vmul.f32 %v964, %v954
        %s967 = sld [smem:[#allocation6 + $0x33]]
        %v968 = vstv %s967
        %v969 = vmul.f32 %v968, %v961
        %v970 = vmul.f32 %v968, %v962
        %v971 = vadd.f32 %v965, %v969
        %v972 = vadd.f32 %v966, %v970
        %v973 = vadd.f32 %v870, %v971
        %v974 = vadd.f32 %v871, %v972
        %s975 = sld [smem:[#allocation6 + $0x9]]
        %v976 = vstv %s975
        %v977 = vmul.f32 %v976, %v953
        %v978 = vmul.f32 %v976, %v954
        %s979 = sld [smem:[#allocation6 + $0x3a]]
        %v980 = vstv %s979
        %v981 = vmul.f32 %v980, %v961
        %v982 = vmul.f32 %v980, %v962
        %v983 = vadd.f32 %v977, %v981
        %v984 = vadd.f32 %v978, %v982
        %v985 = vadd.f32 %v882, %v983
        %v986 = vadd.f32 %v883, %v984
        %s987 = sld [smem:[#allocation6 + $0x10]]
        %v988 = vstv %s987
        %v989 = vmul.f32 %v988, %v953
        %v990 = vmul.f32 %v988, %v954
        %s991 = sld [smem:[#allocation6 + $0x41]]
        %v992 = vstv %s991
        %v993 = vmul.f32 %v992, %v961
        %v994 = vmul.f32 %v992, %v962
        %v995 = vadd.f32 %v989, %v993
        %v996 = vadd.f32 %v990, %v994
        %v997 = vadd.f32 %v894, %v995
        %v998 = vadd.f32 %v895, %v996
        %s999 = sld [smem:[#allocation6 + $0x17]]
        %v1000 = vstv %s999
        %v1001 = vmul.f32 %v1000, %v953
        %v1002 = vmul.f32 %v1000, %v954
        %s1003 = sld [smem:[#allocation6 + $0x48]]
        %v1004 = vstv %s1003
        %v1005 = vmul.f32 %v1004, %v961
        %v1006 = vmul.f32 %v1004, %v962
        %v1007 = vadd.f32 %v1001, %v1005
        %v1008 = vadd.f32 %v1002, %v1006
        %v1009 = vadd.f32 %v906, %v1007
        %v1010 = vadd.f32 %v907, %v1008
        %s1011 = sld [smem:[#allocation6 + $0x1e]]
        %v1012 = vstv %s1011
        %v1013 = vmul.f32 %v1012, %v953
        %v1014 = vmul.f32 %v1012, %v954
        %s1015 = sld [smem:[#allocation6 + $0x4f]]
        %v1016 = vstv %s1015
        %v1017 = vmul.f32 %v1016, %v961
        %v1018 = vmul.f32 %v1016, %v962
        %v1019 = vadd.f32 %v1013, %v1017
        %v1020 = vadd.f32 %v1014, %v1018
        %v1021 = vadd.f32 %v918, %v1019
        %v1022 = vadd.f32 %v919, %v1020
        %s1023 = sld [smem:[#allocation6 + $0x25]]
        %v1024 = vstv %s1023
        %v1025 = vmul.f32 %v1024, %v953
        %v1026 = vmul.f32 %v1024, %v954
        %s1027 = sld [smem:[#allocation6 + $0x56]]
        %v1028 = vstv %s1027
        %v1029 = vmul.f32 %v1028, %v961
        %v1030 = vmul.f32 %v1028, %v962
        %v1031 = vadd.f32 %v1025, %v1029
        %v1032 = vadd.f32 %v1026, %v1030
        %v1033 = vadd.f32 %v930, %v1031
        %v1034 = vadd.f32 %v931, %v1032
        %s1035 = sld [smem:[#allocation6 + $0x2c]]
        %v1036 = vstv %s1035
        %v1037 = vmul.f32 %v1036, %v953
        %v1038 = vmul.f32 %v1036, %v954
        %s1039 = sld [smem:[#allocation6 + $0x5d]]
        %v1040 = vstv %s1039
        %v1041 = vmul.f32 %v1040, %v961
        %v1042 = vmul.f32 %v1040, %v962
        %v1043 = vadd.f32 %v1037, %v1041
        %v1044 = vadd.f32 %v1038, %v1042
        %v1045 = vadd.f32 %v942, %v1043
        %v1046 = vadd.f32 %v943, %v1044
        %s1047 = sld [smem:[#allocation6 + $0x3]]
        %v1048 = vstv %s1047
        %v1049 = vmul.f32 %v1048, %v657
        %v1050 = vmul.f32 %v1048, %v666
        %v1051 = vmul.f32 %v1048, %v675
        %v1052 = vmul.f32 %v1048, %v684
        %s1053 = sld [smem:[#allocation6 + $0x34]]
        %v1054 = vstv %s1053
        %v1055 = vmul.f32 %v1054, %v728
        %v1056 = vmul.f32 %v1054, %v729
        %v1057 = vmul.f32 %v1054, %v730
        %v1058 = vmul.f32 %v1054, %v731
        %v1059 = vadd.f32 %v1049, %v1055
        %v1060 = vadd.f32 %v1050, %v1056
        %v1061 = vadd.f32 %v1051, %v1057
        %v1062 = vadd.f32 %v1052, %v1058
        %v1067 = vsel %vm465, %v1061, %v1059
        %v1068 = vsel %vm465, %v1062, %v1060
        %v1071 = vadd.f32 %v973, %v1067
        %v1072 = vadd.f32 %v974, %v1068
        %s1073 = sld [smem:[#allocation6 + $0xa]]
        %v1074 = vstv %s1073
        %v1075 = vmul.f32 %v1074, %v657
        %v1076 = vmul.f32 %v1074, %v666
        %v1077 = vmul.f32 %v1074, %v675
        %v1078 = vmul.f32 %v1074, %v684
        %s1079 = sld [smem:[#allocation6 + $0x3b]]
        %v1080 = vstv %s1079
        %v1081 = vmul.f32 %v1080, %v728
        %v1082 = vmul.f32 %v1080, %v729
        %v1083 = vmul.f32 %v1080, %v730
        %v1084 = vmul.f32 %v1080, %v731
        %v1085 = vadd.f32 %v1075, %v1081
        %v1086 = vadd.f32 %v1076, %v1082
        %v1087 = vadd.f32 %v1077, %v1083
        %v1088 = vadd.f32 %v1078, %v1084
        %v1093 = vsel %vm465, %v1087, %v1085
        %v1094 = vsel %vm465, %v1088, %v1086
        %v1097 = vadd.f32 %v985, %v1093
        %v1098 = vadd.f32 %v986, %v1094
        %s1099 = sld [smem:[#allocation6 + $0x11]]
        %v1100 = vstv %s1099
        %v1101 = vmul.f32 %v1100, %v657
        %v1102 = vmul.f32 %v1100, %v666
        %v1103 = vmul.f32 %v1100, %v675
        %v1104 = vmul.f32 %v1100, %v684
        %s1105 = sld [smem:[#allocation6 + $0x42]]
        %v1106 = vstv %s1105
        %v1107 = vmul.f32 %v1106, %v728
        %v1108 = vmul.f32 %v1106, %v729
        %v1109 = vmul.f32 %v1106, %v730
        %v1110 = vmul.f32 %v1106, %v731
        %v1111 = vadd.f32 %v1101, %v1107
        %v1112 = vadd.f32 %v1102, %v1108
        %v1113 = vadd.f32 %v1103, %v1109
        %v1114 = vadd.f32 %v1104, %v1110
        %v1119 = vsel %vm465, %v1113, %v1111
        %v1120 = vsel %vm465, %v1114, %v1112
        %v1123 = vadd.f32 %v997, %v1119
        %v1124 = vadd.f32 %v998, %v1120
        %s1125 = sld [smem:[#allocation6 + $0x18]]
        %v1126 = vstv %s1125
        %v1127 = vmul.f32 %v1126, %v657
        %v1128 = vmul.f32 %v1126, %v666
        %v1129 = vmul.f32 %v1126, %v675
        %v1130 = vmul.f32 %v1126, %v684
        %s1131 = sld [smem:[#allocation6 + $0x49]]
        %v1132 = vstv %s1131
        %v1133 = vmul.f32 %v1132, %v728
        %v1134 = vmul.f32 %v1132, %v729
        %v1135 = vmul.f32 %v1132, %v730
        %v1136 = vmul.f32 %v1132, %v731
        %v1137 = vadd.f32 %v1127, %v1133
        %v1138 = vadd.f32 %v1128, %v1134
        %v1139 = vadd.f32 %v1129, %v1135
        %v1140 = vadd.f32 %v1130, %v1136
        %v1145 = vsel %vm465, %v1139, %v1137
        %v1146 = vsel %vm465, %v1140, %v1138
        %v1149 = vadd.f32 %v1009, %v1145
        %v1150 = vadd.f32 %v1010, %v1146
        %s1151 = sld [smem:[#allocation6 + $0x1f]]
        %v1152 = vstv %s1151
        %v1153 = vmul.f32 %v1152, %v657
        %v1154 = vmul.f32 %v1152, %v666
        %v1155 = vmul.f32 %v1152, %v675
        %v1156 = vmul.f32 %v1152, %v684
        %s1157 = sld [smem:[#allocation6 + $0x50]]
        %v1158 = vstv %s1157
        %v1159 = vmul.f32 %v1158, %v728
        %v1160 = vmul.f32 %v1158, %v729
        %v1161 = vmul.f32 %v1158, %v730
        %v1162 = vmul.f32 %v1158, %v731
        %v1163 = vadd.f32 %v1153, %v1159
        %v1164 = vadd.f32 %v1154, %v1160
        %v1165 = vadd.f32 %v1155, %v1161
        %v1166 = vadd.f32 %v1156, %v1162
        %v1171 = vsel %vm465, %v1165, %v1163
        %v1172 = vsel %vm465, %v1166, %v1164
        %v1175 = vadd.f32 %v1021, %v1171
        %v1176 = vadd.f32 %v1022, %v1172
        %s1177 = sld [smem:[#allocation6 + $0x26]]
        %v1178 = vstv %s1177
        %v1179 = vmul.f32 %v1178, %v657
        %v1180 = vmul.f32 %v1178, %v666
        %v1181 = vmul.f32 %v1178, %v675
        %v1182 = vmul.f32 %v1178, %v684
        %s1183 = sld [smem:[#allocation6 + $0x57]]
        %v1184 = vstv %s1183
        %v1185 = vmul.f32 %v1184, %v728
        %v1186 = vmul.f32 %v1184, %v729
        %v1187 = vmul.f32 %v1184, %v730
        %v1188 = vmul.f32 %v1184, %v731
        %v1189 = vadd.f32 %v1179, %v1185
        %v1190 = vadd.f32 %v1180, %v1186
        %v1191 = vadd.f32 %v1181, %v1187
        %v1192 = vadd.f32 %v1182, %v1188
        %v1197 = vsel %vm465, %v1191, %v1189
        %v1198 = vsel %vm465, %v1192, %v1190
        %v1201 = vadd.f32 %v1033, %v1197
        %v1202 = vadd.f32 %v1034, %v1198
        %s1203 = sld [smem:[#allocation6 + $0x2d]]
        %v1204 = vstv %s1203
        %v1205 = vmul.f32 %v1204, %v657
        %v1206 = vmul.f32 %v1204, %v666
        %v1207 = vmul.f32 %v1204, %v675
        %v1208 = vmul.f32 %v1204, %v684
        %s1209 = sld [smem:[#allocation6 + $0x5e]]
        %v1210 = vstv %s1209
        %v1211 = vmul.f32 %v1210, %v728
        %v1212 = vmul.f32 %v1210, %v729
        %v1213 = vmul.f32 %v1210, %v730
        %v1214 = vmul.f32 %v1210, %v731
        %v1215 = vadd.f32 %v1205, %v1211
        %v1216 = vadd.f32 %v1206, %v1212
        %v1217 = vadd.f32 %v1207, %v1213
        %v1218 = vadd.f32 %v1208, %v1214
        %v1223 = vsel %vm465, %v1217, %v1215
        %v1224 = vsel %vm465, %v1218, %v1216
        %v1227 = vadd.f32 %v1045, %v1223
        %v1228 = vadd.f32 %v1046, %v1224
        %1229 = vrot.lane.b32.xlu0 %v740, 127
        %v1230 = vpop.permute.xlu0 %1229
        %1231 = vrot.lane.b32.xlu0 %v741, 127
        %v1232 = vpop.permute.xlu0 %1231
        %vm1233 = vcmp.lt.s32.totalorder %v444, 127
        %v1234 = vsel %vm1233, %v1230, %v1232
        %v1235 = vsel %vm1233, %v1232, %v1230
        %v1236 = vperm.slane %v732, 3
        %v1237 = vperm.slane %v733, 3
        %v1238 = vmul.f32 %v1234, %v1236
        %v1239 = vmul.f32 %v1235, %v1237
        %1240 = vrot.lane.b32.xlu0 %v759, 127
        %v1241 = vpop.permute.xlu0 %1240
        %1242 = vrot.lane.b32.xlu0 %v760, 127
        %v1243 = vpop.permute.xlu0 %1242
        %v1244 = vsel %vm1233, %v1241, %v1243
        %v1245 = vsel %vm1233, %v1243, %v1241
        %v1246 = vmul.f32 %v1244, %v1236
        %v1247 = vmul.f32 %v1245, %v1237
        %s1248 = sld [smem:[#allocation6 + $0x4]]
        %v1249 = vstv %s1248
        %v1250 = vmul.f32 %v1249, %v1238
        %v1251 = vmul.f32 %v1249, %v1239
        %s1252 = sld [smem:[#allocation6 + $0x35]]
        %v1253 = vstv %s1252
        %v1254 = vmul.f32 %v1253, %v1246
        %v1255 = vmul.f32 %v1253, %v1247
        %v1256 = vadd.f32 %v1250, %v1254
        %v1257 = vadd.f32 %v1251, %v1255
        %v1258 = vadd.f32 %v1071, %v1256
        %v1259 = vadd.f32 %v1072, %v1257
        %s1260 = sld [smem:[#allocation6 + $0xb]]
        %v1261 = vstv %s1260
        %v1262 = vmul.f32 %v1261, %v1238
        %v1263 = vmul.f32 %v1261, %v1239
        %s1264 = sld [smem:[#allocation6 + $0x3c]]
        %v1265 = vstv %s1264
        %v1266 = vmul.f32 %v1265, %v1246
        %v1267 = vmul.f32 %v1265, %v1247
        %v1268 = vadd.f32 %v1262, %v1266
        %v1269 = vadd.f32 %v1263, %v1267
        %v1270 = vadd.f32 %v1097, %v1268
        %v1271 = vadd.f32 %v1098, %v1269
        %s1272 = sld [smem:[#allocation6 + $0x12]]
        %v1273 = vstv %s1272
        %v1274 = vmul.f32 %v1273, %v1238
        %v1275 = vmul.f32 %v1273, %v1239
        %s1276 = sld [smem:[#allocation6 + $0x43]]
        %v1277 = vstv %s1276
        %v1278 = vmul.f32 %v1277, %v1246
        %v1279 = vmul.f32 %v1277, %v1247
        %v1280 = vadd.f32 %v1274, %v1278
        %v1281 = vadd.f32 %v1275, %v1279
        %v1282 = vadd.f32 %v1123, %v1280
        %v1283 = vadd.f32 %v1124, %v1281
        %s1284 = sld [smem:[#allocation6 + $0x19]]
        %v1285 = vstv %s1284
        %v1286 = vmul.f32 %v1285, %v1238
        %v1287 = vmul.f32 %v1285, %v1239
        %s1288 = sld [smem:[#allocation6 + $0x4a]]
        %v1289 = vstv %s1288
        %v1290 = vmul.f32 %v1289, %v1246
        %v1291 = vmul.f32 %v1289, %v1247
        %v1292 = vadd.f32 %v1286, %v1290
        %v1293 = vadd.f32 %v1287, %v1291
        %v1294 = vadd.f32 %v1149, %v1292
        %v1295 = vadd.f32 %v1150, %v1293
        %s1296 = sld [smem:[#allocation6 + $0x20]]
        %v1297 = vstv %s1296
        %v1298 = vmul.f32 %v1297, %v1238
        %v1299 = vmul.f32 %v1297, %v1239
        %s1300 = sld [smem:[#allocation6 + $0x51]]
        %v1301 = vstv %s1300
        %v1302 = vmul.f32 %v1301, %v1246
        %v1303 = vmul.f32 %v1301, %v1247
        %v1304 = vadd.f32 %v1298, %v1302
        %v1305 = vadd.f32 %v1299, %v1303
        %v1306 = vadd.f32 %v1175, %v1304
        %v1307 = vadd.f32 %v1176, %v1305
        %s1308 = sld [smem:[#allocation6 + $0x27]]
        %v1309 = vstv %s1308
        %v1310 = vmul.f32 %v1309, %v1238
        %v1311 = vmul.f32 %v1309, %v1239
        %s1312 = sld [smem:[#allocation6 + $0x58]]
        %v1313 = vstv %s1312
        %v1314 = vmul.f32 %v1313, %v1246
        %v1315 = vmul.f32 %v1313, %v1247
        %v1316 = vadd.f32 %v1310, %v1314
        %v1317 = vadd.f32 %v1311, %v1315
        %v1318 = vadd.f32 %v1201, %v1316
        %v1319 = vadd.f32 %v1202, %v1317
        %s1320 = sld [smem:[#allocation6 + $0x2e]]
        %v1321 = vstv %s1320
        %v1322 = vmul.f32 %v1321, %v1238
        %v1323 = vmul.f32 %v1321, %v1239
        %s1324 = sld [smem:[#allocation6 + $0x5f]]
        %v1325 = vstv %s1324
        %v1326 = vmul.f32 %v1325, %v1246
        %v1327 = vmul.f32 %v1325, %v1247
        %v1328 = vadd.f32 %v1322, %v1326
        %v1329 = vadd.f32 %v1323, %v1327
        %v1330 = vadd.f32 %v1227, %v1328
        %v1331 = vadd.f32 %v1228, %v1329
        %1332 = vrot.lane.b32.xlu0 %v740, 126
        %v1333 = vpop.permute.xlu0 %1332
        %1334 = vrot.lane.b32.xlu0 %v741, 126
        %v1335 = vpop.permute.xlu0 %1334
        %vm1336 = vcmp.lt.s32.totalorder %v444, 126
        %v1337 = vsel %vm1336, %v1333, %v1335
        %v1338 = vsel %vm1336, %v1335, %v1333
        %v1339 = vperm.slane %v732, 4
        %v1340 = vperm.slane %v733, 4
        %v1341 = vmul.f32 %v1337, %v1339
        %v1342 = vmul.f32 %v1338, %v1340
        %1343 = vrot.lane.b32.xlu0 %v759, 126
        %v1344 = vpop.permute.xlu0 %1343
        %1345 = vrot.lane.b32.xlu0 %v760, 126
        %v1346 = vpop.permute.xlu0 %1345
        %v1347 = vsel %vm1336, %v1344, %v1346
        %v1348 = vsel %vm1336, %v1346, %v1344
        %v1349 = vmul.f32 %v1347, %v1339
        %v1350 = vmul.f32 %v1348, %v1340
        %s1351 = sld [smem:[#allocation6 + $0x5]]
        %v1352 = vstv %s1351
        %v1353 = vmul.f32 %v1352, %v1341
        %v1354 = vmul.f32 %v1352, %v1342
        %s1355 = sld [smem:[#allocation6 + $0x36]]
        %v1356 = vstv %s1355
        %v1357 = vmul.f32 %v1356, %v1349
        %v1358 = vmul.f32 %v1356, %v1350
        %v1359 = vadd.f32 %v1353, %v1357
        %v1360 = vadd.f32 %v1354, %v1358
        %v1361 = vadd.f32 %v1258, %v1359
        %v1362 = vadd.f32 %v1259, %v1360
        %s1363 = sld [smem:[#allocation6 + $0xc]]
        %v1364 = vstv %s1363
        %v1365 = vmul.f32 %v1364, %v1341
        %v1366 = vmul.f32 %v1364, %v1342
        %s1367 = sld [smem:[#allocation6 + $0x3d]]
        %v1368 = vstv %s1367
        %v1369 = vmul.f32 %v1368, %v1349
        %v1370 = vmul.f32 %v1368, %v1350
        %v1371 = vadd.f32 %v1365, %v1369
        %v1372 = vadd.f32 %v1366, %v1370
        %v1373 = vadd.f32 %v1270, %v1371
        %v1374 = vadd.f32 %v1271, %v1372
        %s1375 = sld [smem:[#allocation6 + $0x13]]
        %v1376 = vstv %s1375
        %v1377 = vmul.f32 %v1376, %v1341
        %v1378 = vmul.f32 %v1376, %v1342
        %s1379 = sld [smem:[#allocation6 + $0x44]]
        %v1380 = vstv %s1379
        %v1381 = vmul.f32 %v1380, %v1349
        %v1382 = vmul.f32 %v1380, %v1350
        %v1383 = vadd.f32 %v1377, %v1381
        %v1384 = vadd.f32 %v1378, %v1382
        %v1385 = vadd.f32 %v1282, %v1383
        %v1386 = vadd.f32 %v1283, %v1384
        %s1387 = sld [smem:[#allocation6 + $0x1a]]
        %v1388 = vstv %s1387
        %v1389 = vmul.f32 %v1388, %v1341
        %v1390 = vmul.f32 %v1388, %v1342
        %s1391 = sld [smem:[#allocation6 + $0x4b]]
        %v1392 = vstv %s1391
        %v1393 = vmul.f32 %v1392, %v1349
        %v1394 = vmul.f32 %v1392, %v1350
        %v1395 = vadd.f32 %v1389, %v1393
        %v1396 = vadd.f32 %v1390, %v1394
        %v1397 = vadd.f32 %v1294, %v1395
        %v1398 = vadd.f32 %v1295, %v1396
        %s1399 = sld [smem:[#allocation6 + $0x21]]
        %v1400 = vstv %s1399
        %v1401 = vmul.f32 %v1400, %v1341
        %v1402 = vmul.f32 %v1400, %v1342
        %s1403 = sld [smem:[#allocation6 + $0x52]]
        %v1404 = vstv %s1403
        %v1405 = vmul.f32 %v1404, %v1349
        %v1406 = vmul.f32 %v1404, %v1350
        %v1407 = vadd.f32 %v1401, %v1405
        %v1408 = vadd.f32 %v1402, %v1406
        %v1409 = vadd.f32 %v1306, %v1407
        %v1410 = vadd.f32 %v1307, %v1408
        %s1411 = sld [smem:[#allocation6 + $0x28]]
        %v1412 = vstv %s1411
        %v1413 = vmul.f32 %v1412, %v1341
        %v1414 = vmul.f32 %v1412, %v1342
        %s1415 = sld [smem:[#allocation6 + $0x59]]
        %v1416 = vstv %s1415
        %v1417 = vmul.f32 %v1416, %v1349
        %v1418 = vmul.f32 %v1416, %v1350
        %v1419 = vadd.f32 %v1413, %v1417
        %v1420 = vadd.f32 %v1414, %v1418
        %v1421 = vadd.f32 %v1318, %v1419
        %v1422 = vadd.f32 %v1319, %v1420
        %s1423 = sld [smem:[#allocation6 + $0x2f]]
        %v1424 = vstv %s1423
        %v1425 = vmul.f32 %v1424, %v1341
        %v1426 = vmul.f32 %v1424, %v1342
        %s1427 = sld [smem:[#allocation6 + $0x60]]
        %v1428 = vstv %s1427
        %v1429 = vmul.f32 %v1428, %v1349
        %v1430 = vmul.f32 %v1428, %v1350
        %v1431 = vadd.f32 %v1425, %v1429
        %v1432 = vadd.f32 %v1426, %v1430
        %v1433 = vadd.f32 %v1330, %v1431
        %v1434 = vadd.f32 %v1331, %v1432
        %1435 = vrot.lane.b32.xlu0 %v740, 125
        %v1436 = vpop.permute.xlu0 %1435
        %1437 = vrot.lane.b32.xlu0 %v741, 125
        %v1438 = vpop.permute.xlu0 %1437
        %vm1439 = vcmp.lt.s32.totalorder %v444, 125
        %v1440 = vsel %vm1439, %v1436, %v1438
        %v1441 = vsel %vm1439, %v1438, %v1436
        %v1442 = vperm.slane %v732, 5
        %v1443 = vperm.slane %v733, 5
        %v1444 = vmul.f32 %v1440, %v1442
        %v1445 = vmul.f32 %v1441, %v1443
        %1446 = vrot.lane.b32.xlu0 %v759, 125
        %v1447 = vpop.permute.xlu0 %1446
        %1448 = vrot.lane.b32.xlu0 %v760, 125
        %v1449 = vpop.permute.xlu0 %1448
        %v1450 = vsel %vm1439, %v1447, %v1449
        %v1451 = vsel %vm1439, %v1449, %v1447
        %v1452 = vmul.f32 %v1450, %v1442
        %v1453 = vmul.f32 %v1451, %v1443
        %s1454 = sld [smem:[#allocation6 + $0x6]]
        %v1455 = vstv %s1454
        %v1456 = vmul.f32 %v1455, %v1444
        %v1457 = vmul.f32 %v1455, %v1445
        %s1458 = sld [smem:[#allocation6 + $0x37]]
        %v1459 = vstv %s1458
        %v1460 = vmul.f32 %v1459, %v1452
        %v1461 = vmul.f32 %v1459, %v1453
        %v1462 = vadd.f32 %v1456, %v1460
        %v1463 = vadd.f32 %v1457, %v1461
        %v1464 = vadd.f32 %v1361, %v1462
        %v1465 = vadd.f32 %v1362, %v1463
        %s1466 = sld [smem:[#allocation6 + $0xd]]
        %v1467 = vstv %s1466
        %v1468 = vmul.f32 %v1467, %v1444
        %v1469 = vmul.f32 %v1467, %v1445
        %s1470 = sld [smem:[#allocation6 + $0x3e]]
        %v1471 = vstv %s1470
        %v1472 = vmul.f32 %v1471, %v1452
        %v1473 = vmul.f32 %v1471, %v1453
        %v1474 = vadd.f32 %v1468, %v1472
        %v1475 = vadd.f32 %v1469, %v1473
        %v1476 = vadd.f32 %v1373, %v1474
        %v1477 = vadd.f32 %v1374, %v1475
        %s1478 = sld [smem:[#allocation6 + $0x14]]
        %v1479 = vstv %s1478
        %v1480 = vmul.f32 %v1479, %v1444
        %v1481 = vmul.f32 %v1479, %v1445
        %s1482 = sld [smem:[#allocation6 + $0x45]]
        %v1483 = vstv %s1482
        %v1484 = vmul.f32 %v1483, %v1452
        %v1485 = vmul.f32 %v1483, %v1453
        %v1486 = vadd.f32 %v1480, %v1484
        %v1487 = vadd.f32 %v1481, %v1485
        %v1488 = vadd.f32 %v1385, %v1486
        %v1489 = vadd.f32 %v1386, %v1487
        %s1490 = sld [smem:[#allocation6 + $0x1b]]
        %v1491 = vstv %s1490
        %v1492 = vmul.f32 %v1491, %v1444
        %v1493 = vmul.f32 %v1491, %v1445
        %s1494 = sld [smem:[#allocation6 + $0x4c]]
        %v1495 = vstv %s1494
        %v1496 = vmul.f32 %v1495, %v1452
        %v1497 = vmul.f32 %v1495, %v1453
        %v1498 = vadd.f32 %v1492, %v1496
        %v1499 = vadd.f32 %v1493, %v1497
        %v1500 = vadd.f32 %v1397, %v1498
        %v1501 = vadd.f32 %v1398, %v1499
        %s1502 = sld [smem:[#allocation6 + $0x22]]
        %v1503 = vstv %s1502
        %v1504 = vmul.f32 %v1503, %v1444
        %v1505 = vmul.f32 %v1503, %v1445
        %s1506 = sld [smem:[#allocation6 + $0x53]]
        %v1507 = vstv %s1506
        %v1508 = vmul.f32 %v1507, %v1452
        %v1509 = vmul.f32 %v1507, %v1453
        %v1510 = vadd.f32 %v1504, %v1508
        %v1511 = vadd.f32 %v1505, %v1509
        %v1512 = vadd.f32 %v1409, %v1510
        %v1513 = vadd.f32 %v1410, %v1511
        %s1514 = sld [smem:[#allocation6 + $0x29]]
        %v1515 = vstv %s1514
        %v1516 = vmul.f32 %v1515, %v1444
        %v1517 = vmul.f32 %v1515, %v1445
        %s1518 = sld [smem:[#allocation6 + $0x5a]]
        %v1519 = vstv %s1518
        %v1520 = vmul.f32 %v1519, %v1452
        %v1521 = vmul.f32 %v1519, %v1453
        %v1522 = vadd.f32 %v1516, %v1520
        %v1523 = vadd.f32 %v1517, %v1521
        %v1524 = vadd.f32 %v1421, %v1522
        %v1525 = vadd.f32 %v1422, %v1523
        %s1526 = sld [smem:[#allocation6 + $0x30]]
        %v1527 = vstv %s1526
        %v1528 = vmul.f32 %v1527, %v1444
        %v1529 = vmul.f32 %v1527, %v1445
        %s1530 = sld [smem:[#allocation6 + $0x61]]
        %v1531 = vstv %s1530
        %v1532 = vmul.f32 %v1531, %v1452
        %v1533 = vmul.f32 %v1531, %v1453
        %v1534 = vadd.f32 %v1528, %v1532
        %v1535 = vadd.f32 %v1529, %v1533
        %v1536 = vadd.f32 %v1433, %v1534
        %v1537 = vadd.f32 %v1434, %v1535
        %1538 = vrot.lane.b32.xlu0 %v1464, 48
        %v1539 = vpop.permute.xlu0 %1538
        %1540 = vrot.lane.b32.xlu0 %v1465, 48
        %v1541 = vpop.permute.xlu0 %1540
        %vm1542 = vcmp.lt.s32.totalorder %v444, 48
        %v1543 = vsel %vm1542, %v1539, %v1541
        %v1544 = vsel %vm1542, %v1541, %v1539
        %v1545 = vperm.slane %v732, 6
        %v1546 = vperm.slane %v733, 6
        %v1547 = vmul.f32 %v1544, %v1545
        %v1548 = vmul.f32 %v1543, %v1546
        %1549 = vrot.lane.b32.xlu0 %v1476, 32
        %v1550 = vpop.permute.xlu0 %1549
        %1551 = vrot.lane.b32.xlu0 %v1477, 32
        %v1552 = vpop.permute.xlu0 %1551
        %vm1553 = vcmp.lt.s32.totalorder %v444, 32
        %v1554 = vsel %vm1553, %v1550, %v1552
        %v1555 = vsel %vm1553, %v1552, %v1550
        %v1556 = vperm.slane %v732, 7
        %v1557 = vperm.slane %v733, 7
        %v1558 = vmul.f32 %v1555, %v1556
        %v1559 = vmul.f32 %v1554, %v1557
        %v1560 = vadd.f32 %v1547, %v1558
        %v1561 = vadd.f32 %v1548, %v1559
        %1562 = vrot.lane.b32.xlu0 %v1488, 16
        %v1563 = vpop.permute.xlu0 %1562
        %1564 = vrot.lane.b32.xlu0 %v1489, 16
        %v1565 = vpop.permute.xlu0 %1564
        %vm1566 = vcmp.lt.s32.totalorder %v444, 16
        %v1567 = vsel %vm1566, %v1563, %v1565
        %v1568 = vsel %vm1566, %v1565, %v1563
        %v1569 = vperm.slane %v734, 0
        %v1570 = vperm.slane %v735, 0
        %v1571 = vmul.f32 %v1568, %v1569
        %v1572 = vmul.f32 %v1567, %v1570
        %v1573 = vadd.f32 %v1560, %v1571
        %v1574 = vadd.f32 %v1561, %v1572
        %v1575 = vadd.f32 %v1573, %v1500
        %v1576 = vadd.f32 %v1574, %v1501
        %1577 = vrot.lane.b32.xlu0 %v1512, 112
        %v1578 = vpop.permute.xlu0 %1577
        %1579 = vrot.lane.b32.xlu0 %v1513, 112
        %v1580 = vpop.permute.xlu0 %1579
        %vm1581 = vcmp.lt.s32.totalorder %v444, 112
        %v1582 = vsel %vm1581, %v1578, %v1580
        %v1583 = vsel %vm1581, %v1580, %v1578
        %v1584 = vperm.slane %v734, 1
        %v1585 = vperm.slane %v735, 1
        %v1586 = vmul.f32 %v1582, %v1584
        %v1587 = vmul.f32 %v1583, %v1585
        %v1588 = vadd.f32 %v1575, %v1586
        %v1589 = vadd.f32 %v1576, %v1587
        %1590 = vrot.lane.b32.xlu0 %v1524, 96
        %v1591 = vpop.permute.xlu0 %1590
        %1592 = vrot.lane.b32.xlu0 %v1525, 96
        %v1593 = vpop.permute.xlu0 %1592
        %vm1594 = vcmp.lt.s32.totalorder %v444, 96
        %v1595 = vsel %vm1594, %v1591, %v1593
        %v1596 = vsel %vm1594, %v1593, %v1591
        %v1597 = vperm.slane %v734, 2
        %v1598 = vperm.slane %v735, 2
        %v1599 = vmul.f32 %v1595, %v1597
        %v1600 = vmul.f32 %v1596, %v1598
        %v1601 = vadd.f32 %v1588, %v1599
        %v1602 = vadd.f32 %v1589, %v1600
        %1603 = vrot.lane.b32.xlu0 %v1536, 80
        %v1604 = vpop.permute.xlu0 %1603
        %1605 = vrot.lane.b32.xlu0 %v1537, 80
        %v1606 = vpop.permute.xlu0 %1605
        %vm1607 = vcmp.lt.s32.totalorder %v444, 80
        %v1608 = vsel %vm1607, %v1604, %v1606
        %v1609 = vsel %vm1607, %v1606, %v1604
        %v1610 = vperm.slane %v734, 3
        %v1611 = vperm.slane %v735, 3
        %v1612 = vmul.f32 %v1608, %v1610
        %v1613 = vmul.f32 %v1609, %v1611
        %v1614 = vadd.f32 %v1601, %v1612
        %v1615 = vadd.f32 %v1602, %v1613
        %s1616 = sld [smem:[#allocation7]]
        %v1617 = vstv %s1616
        %v1618 = vmul.f32 %v1614, %v1617
        %v1619 = vmul.f32 %v1615, %v1617
        %s1620 = sld [smem:[#allocation7 + $0x1]]
        %v1621 = vstv %s1620
        %v1622 = vadd.f32 %v1618, %v1621
        %v1623 = vadd.f32 %v1619, %v1621
        %v1624 = vxor.u32 %v1622, 2147483648
        %v1625 = vxor.u32 %v1623, 2147483648
        %v1626 = vmul.f32 %v1624, 1.442695
        %v1627 = vpow.pop %v1626
        %v1628 = vmul.f32 %v1625, 1.442695
        %v1629 = vpow.pop %v1628
        %v1630 = vadd.f32 %v1627, 1.0
        %v1631 = vadd.f32 %v1629, 1.0
        %v1632 = vrcp.pop %v1630
        %v1633 = vmul.f32 %v1630, %v1632
        %v1634 = vsub.f32 1.0, %v1633
        %v1635 = vmul.f32 %v1632, %v1634
        %v1636 = vadd.f32 %v1632, %v1635
        %vm1637 = vweird.f32 %v1630
        %vm1638 = vweird.f32 %v1632
        %vm1639 = vmor %vm1637, %vm1638
        %v1640 = vsel %vm1639, %v1632, %v1636
        %v1641 = vand.u32 2147483647, %v1630
        %vm1642 = vcmp.eq.f32.partialorder %v1641, 8.507059e+37
        %v1643 = vand.u32 %v1630, 2147483648
        %v1644 = vor.u32 1.1754944e-38, %v1643
        %v1645 = vsel %vm1642, %v1644, %v1640
        %v1646 = vmul.f32 1.0, %v1645
        %v1647 = vrcp.pop %v1631
        %v1648 = vmul.f32 %v1631, %v1647
        %v1649 = vsub.f32 1.0, %v1648
        %v1650 = vmul.f32 %v1647, %v1649
        %v1651 = vadd.f32 %v1647, %v1650
        %vm1652 = vweird.f32 %v1631
        %vm1653 = vweird.f32 %v1647
        %vm1654 = vmor %vm1652, %vm1653
        %v1655 = vsel %vm1654, %v1647, %v1651
        %v1656 = vand.u32 2147483647, %v1631
        %vm1657 = vcmp.eq.f32.partialorder %v1656, 8.507059e+37
        %v1658 = vand.u32 %v1631, 2147483648
        %v1659 = vor.u32 1.1754944e-38, %v1658
        %v1660 = vsel %vm1657, %v1659, %v1655
        %v1661 = vmul.f32 1.0, %v1660
        %v1664 = vrot.slane %v1661, 7
        %vm1665 = vcmask 1040384
        %v1666 = vsel %vm1665, %v1646, %v1664
        %v1667 = vsel %vm465, %v1646, %v1664
        %v1668 = vrot.slane %v1667, 1
        %v1669 = vperm.slane %v1666, 0
        %v1670 = vperm.slane %v1666, 1
        %v1671 = vperm.slane %v1668, 0
        %v1672 = vperm.slane %v1668, 1
        %v1677 = vmul.f32 %v633, %v1669
        %v1678 = vmul.f32 %v634, %v1670
        %v1679 = vmul.f32 %v635, %v1669
        %v1680 = vmul.f32 %v636, %v1670
        %v1681 = vmul.f32 %v637, %v1669
        %v1682 = vmul.f32 %v638, %v1670
        %v1683 = vmul.f32 %v639, %v1669
        %v1684 = vmul.f32 %v640, %v1670
        %v1685 = vmul.f32 %v641, %v1671
        %v1686 = vmul.f32 %v642, %v1672
        %v1687 = vmul.f32 %v643, %v1671
        %v1688 = vmul.f32 %v644, %v1672
        %v1689 = vmul.f32 %v645, %v1671
        %v1690 = vmul.f32 %v646, %v1672
        %v1691 = vmul.f32 %v647, %v1671
        %v1692 = vmul.f32 %v648, %v1672
        %1693 = vst [vmem:[%s353] sm:$0xff] %v1677
        %1694 = vst [vmem:[%s353 + $0x8] sm:$0xff] %v1678
        %1695 = vst [vmem:[%s353 + $0x10] sm:$0xff] %v1679
        %1696 = vst [vmem:[%s353 + $0x18] sm:$0xff] %v1680
        %1697 = vst [vmem:[%s353 + $0x20] sm:$0xff] %v1681
        %1698 = vst [vmem:[%s353 + $0x28] sm:$0xff] %v1682
        %1699 = vst [vmem:[%s353 + $0x30] sm:$0xff] %v1683
        %1700 = vst [vmem:[%s353 + $0x38] sm:$0xff] %v1684
        %1701 = vst [vmem:[%s353 + $0x40] sm:$0xff] %v1685
        %1702 = vst [vmem:[%s353 + $0x48] sm:$0xff] %v1686
        %1703 = vst [vmem:[%s353 + $0x50] sm:$0xff] %v1687
        %1704 = vst [vmem:[%s353 + $0x58] sm:$0xff] %v1688
        %1705 = vst [vmem:[%s353 + $0x60] sm:$0xff] %v1689
        %1706 = vst [vmem:[%s353 + $0x68] sm:$0xff] %v1690
        %1707 = vst [vmem:[%s353 + $0x70] sm:$0xff] %v1691
        %1708 = vst [vmem:[%s353 + $0x78] sm:$0xff] %v1692
        %s1709 = sand.u32 %s208, 1
        %s1710 = scalar_lea.sflag [#allocation4], %s1709
        %s1711 = sand.u32 %s208, 1
        %s1712 = smul.addr %s1711, 128
        %s1713 = scalar_lea.vmem [#allocation9], %s1712
        // Predicated region
        $region65: #{tpu_custom_call.1} parent=51 // pred_check
          %p1714 = pneg %p218
        $region66: #{tpu_custom_call.1} parent=51 // pred_check_branch
          %1716 = sbr.rel (%p1714) target = $region68
        $region67: #{tpu_custom_call.1} parent=51 // pred_region
          %s1717 = smul.u32 2, %s27
          %1719 = vsyncadd %s1710, 0
          %s1720 = smul.addr %s1717, 8
          %s1721 = smul.addr %s1720, 8
          %s1722 = scalar_lea.hbm %s8, %s1721
          %s1723 = sshll.u32 %s1713, 4
          %s1724 = int_to_ptr.vmem [resolvable:$true] %s1723
          %s1725 = sshll.u32 %s1722, 4
          %s1726 = int_to_ptr.hbm [resolvable:$true] %s1725
          %1731 = dma.vmem_to_hbm [thread:$0]  %s1724, 2048, %s1726, %s1710, 256, 256, 16
        $region68: #{tpu_custom_call.1} parent=51 // pred_fallthru
          _
      $region52: #{tpu_custom_call.1} parent=5 // pred_fallthru
        _
      %p1732 = scmp.le.s32.totalorder 2, %s22
      // Predicated region
      $region69: #{tpu_custom_call.1} parent=5 // pred_check
        %p1733 = pneg %p1732
      $region70: #{tpu_custom_call.1} parent=5 // pred_check_branch
        %1735 = sbr.rel (%p1733) target = $region72
      $region71: #{tpu_custom_call.1} parent=5 // pred_region
        %s1736 = ssub.s32 %s22, 2
        // Predicated region
        $region73: #{tpu_custom_call.1} parent=71 // pred_check
          %p1737 = pneg %p224
        $region74: #{tpu_custom_call.1} parent=71 // pred_check_branch
          %1739 = sbr.rel (%p1737) target = $region76
        $region75: #{tpu_custom_call.1} parent=71 // pred_region
          %s1740 = sand.u32 %s209, 1
          %s1741 = scalar_lea.sflag [#allocation4], %s1740
          %s1742 = sand.u32 %s209, 1
          %s1743 = smul.addr %s1742, 128
          %s1744 = scalar_lea.vmem [#allocation9], %s1743
          %1746 = dma.done %s1741, 2048
        $region76: #{tpu_custom_call.1} parent=71 // pred_fallthru
          _
      $region72: #{tpu_custom_call.1} parent=5 // pred_fallthru
        _
    $region6: #{tpu_custom_call.1} parent=1 // loop_footer
      %s26 = sadd.s32 1, %s22
    $region7: #{tpu_custom_call.1} parent=1 // loop_footer_branch
      %21 = sbr.rel target = $region3
    $region8: #{tpu_custom_call.1} parent=1 // loop_exit
      _
    %1747 = vsyncpa [#allocation3], 1
    %s1748 = scalar_lea.sflag [#allocation3], 1
    %1749 = vsyncpa %s1748, 1
    %1750 = vsyncpa [#allocation4], 1
    %s1751 = scalar_lea.sflag [#allocation4], 1
    %1752 = vsyncpa %s1751, 1
    %1753 = vsyncpa [#allocation5], 1
    %s1754 = scalar_lea.sflag [#allocation5], 1
    %1755 = vsyncpa %s1754, 1
    %1756 = vsyncpa [#allocation8], 1

</llo_original>
